<compile_context>
chip_gen: v7x
topology: tpu7x:2x2x1
jax: 0.10.0
libtpu: 0.0.40
codegen_flags: <defaults>
</compile_context>

<pallas_src>
import functools

import jax
import jax.numpy as jnp
from jax.experimental import pallas as pl
from jax.experimental.pallas import tpu as pltpu

_LANE = 128
_INV_SQRT2 = 0.7071067811865476
_SQRT_2_OVER_PI = 0.7978845608028654


def ffn_kernel(x_ref, w1_ref, b1_ref, w2_ref, b2_ref, o_ref, *, gelu_approx):
    # linear_1: cast the streamed f32 x tile to bf16 at the MXU input, accumulate in f32.
    h = jnp.dot(x_ref[...].astype(jnp.bfloat16), w1_ref[...],
                preferred_element_type=jnp.float32)
    h = h + b1_ref[...]                       # implicit [1, H] row broadcast
    # dropout_1 -> identity (eval)
    if gelu_approx:
        # tanh-approx GELU: transcendental goes to the EUP slot (frees the VALU).
        h = 0.5 * h * (1.0 + jnp.tanh(_SQRT_2_OVER_PI * (h + 0.044715 * h * h * h)))
    else:
        # exact-erf GELU (PyTorch nn.GELU default), computed in f32.
        h = 0.5 * h * (1.0 + jax.lax.erf(h * _INV_SQRT2))
    # linear_2: bf16 MXU operands, f32 accumulation.
    out = jnp.dot(h.astype(w2_ref.dtype), w2_ref[...],
                  preferred_element_type=jnp.float32)
    out = out + b2_ref[...]                   # implicit [1, out] row broadcast
    # dropout_2 -> identity (eval)
    o_ref[...] = out.astype(o_ref.dtype)


def _pad_axis(a, axis, multiple):
    pad = (-a.shape[axis]) % multiple
    if pad == 0:
        return a
    widths = [(0, 0)] * a.ndim
    widths[axis] = (0, pad)
    return jnp.pad(a, widths)


def _round_up(v, m):
    return ((v + m - 1) // m) * m


def _vmem_capacity_bytes():
    try:
        return int(pltpu.get_tpu_info().vmem_capacity_bytes)
    except Exception:
        return 64 << 20   # conservative (v7x per-TensorCore VMEM)


def prepare_params(w1, b1, w2, b2):
    """Pad to lane-dense multiples of 128 and cast once (hoisted out of the per-call path).

    Zero padding is mathematically exact for this MLP: padded rows/cols contribute
    nothing and the padded output columns are sliced away.
    """
    w1_p = _pad_axis(_pad_axis(w1, 0, _LANE), 1, _LANE).astype(jnp.bfloat16)
    b1_p = _pad_axis(jnp.reshape(b1, (1, -1)), 1, _LANE).astype(jnp.float32)
    w2_p = _pad_axis(_pad_axis(w2, 0, _LANE), 1, _LANE).astype(jnp.bfloat16)
    b2_p = _pad_axis(jnp.reshape(b2, (1, -1)), 1, _LANE).astype(jnp.float32)
    return (w1_p, b1_p, w2_p, b2_p), int(w2.shape[1])


@functools.partial(
    jax.jit,
    static_argnames=("out_dim", "block_n", "gelu_approx", "out_dtype",
                     "single_buffer_weights"))
def feed_forward_prepared(x, w1_bf, b1_f, w2_bf, b2_f, *, out_dim, block_n=512,
                          gelu_approx=False, out_dtype=jnp.float32,
                          single_buffer_weights=True):
    n = x.shape[0]
    in_p, hid_p = w1_bf.shape
    out_p = w2_bf.shape[1]

    # Clamp the row tile for small N (still a multiple of 8 for sublane tiling),
    # then zero-pad rows so the grid divides evenly.
    block_n_eff = min(block_n, _round_up(n, 8))
    x_p = _pad_axis(_pad_axis(x, 0, block_n_eff), 1, _LANE).astype(jnp.float32)
    assert x_p.shape[1] == in_p, "x feature dim inconsistent with prepared W1"
    n_p = x_p.shape[0]
    grid_steps = n_p // block_n_eff

    out_bytes = jnp.dtype(out_dtype).itemsize

    # Scoped-VMEM budget: double-buffered x/out tiles, single-buffered resident weights/biases,
    # f32 hidden intermediate, headroom.  Capped per-generation (v7x = 64 MiB physical).
    vmem_bytes = int(
        2 * block_n_eff * in_p * 4                   # x tile (f32), double-buffered
        + 2 * block_n_eff * out_p * out_bytes        # out tile, double-buffered
        + (in_p * hid_p + hid_p * out_p) * 2         # W1/W2 (bf16), single-buffered
        + (hid_p + out_p) * 4                        # biases (f32)
        + block_n_eff * hid_p * 4                    # f32 hidden activations
        + (4 << 20))                                 # headroom
    vmem_cap = int(0.85 * _vmem_capacity_bytes())
    vmem_bytes = min(max(vmem_bytes, 32 << 20), vmem_cap)

    # "parallel" only when each v7x core still gets >= 2 pipelined steps; otherwise keep the
    # whole (short) grid on one core.
    dim_sem = ("parallel",) if grid_steps >= 4 else ("arbitrary",)

    flops = 2 * n_p * in_p * hid_p + 2 * n_p * hid_p * out_p
    transcendentals = n_p * hid_p                    # one GELU transcendental per hidden elem
    bytes_accessed = (n_p * in_p * 4                 # f32 x
                      + in_p * hid_p * 2 + hid_p * out_p * 2   # bf16 weights
                      + (hid_p + out_p) * 4                    # f32 biases
                      + n_p * out_p * out_bytes)               # output

    def _call(single_buffer):
        w_kwargs = {"pipeline_mode": pl.Buffered(1)} if single_buffer else {}
        return pl.pallas_call(
            functools.partial(ffn_kernel, gelu_approx=gelu_approx),
            out_shape=jax.ShapeDtypeStruct((n_p, out_p), out_dtype),
            grid_spec=pltpu.PrefetchScalarGridSpec(
                num_scalar_prefetch=0,
                grid=(grid_steps,),
                in_specs=[
                    # x tile (streamed, f32, cast to bf16 in-kernel).
                    # TODO(synk): pl.Buffered(3) here if the x DMA is still exposed in traces.
                    pl.BlockSpec((block_n_eff, in_p), lambda i: (i, 0)),
                    pl.BlockSpec((in_p, hid_p), lambda i: (0, 0), **w_kwargs),   # W1 resident
                    pl.BlockSpec((1, hid_p), lambda i: (0, 0), **w_kwargs),      # b1
                    pl.BlockSpec((hid_p, out_p), lambda i: (0, 0), **w_kwargs),  # W2 resident
                    pl.BlockSpec((1, out_p), lambda i: (0, 0), **w_kwargs),      # b2
                ],
                out_specs=pl.BlockSpec((block_n_eff, out_p), lambda i: (i, 0)),
            ),
            compiler_params=pltpu.CompilerParams(
                dimension_semantics=dim_sem,
                vmem_limit_bytes=vmem_bytes,
            ),
            cost_estimate=pl.CostEstimate(
                flops=flops,
                transcendentals=transcendentals,
                bytes_accessed=bytes_accessed,
            ),
        )(x_p, w1_bf, b1_f, w2_bf, b2_f)

    if single_buffer_weights:
        try:
            out_padded = _call(True)
        except Exception:
            # Fallback if this JAX build rejects Buffered(1) on constant blocks.
            out_padded = _call(False)
    else:
        out_padded = _call(False)

    return out_padded[:n, :out_dim]


def feed_forward(x, w1, b1, w2, b2, *, block_n=512, gelu_approx=False, out_dtype=None):
    """One-shot convenience wrapper.  For repeated calls, run prepare_params() once and
    call feed_forward_prepared() directly (avoids re-padding / re-casting weights every call)."""
    params, out_dim = prepare_params(w1, b1, w2, b2)
    od = jnp.dtype(out_dtype) if out_dtype is not None else x.dtype
    return feed_forward_prepared(x, *params, out_dim=out_dim, block_n=block_n,
                                 gelu_approx=gelu_approx, out_dtype=od)


def init_params(key, dim, hidden_dim_multiplier, input_dim_multiplier=1,
                dtype=jnp.float32):
    """Deterministic synthetic init matching nn.Linear shapes."""
    input_dim = int(dim * input_dim_multiplier)
    hidden_dim = int(dim * hidden_dim_multiplier)
    k1, k2, k3, k4 = jax.random.split(key, 4)
    lim1 = 1.0 / jnp.sqrt(input_dim)
    lim2 = 1.0 / jnp.sqrt(hidden_dim)
    w1 = jax.random.uniform(k1, (input_dim, hidden_dim), dtype, -lim1, lim1)
    b1 = jax.random.uniform(k2, (1, hidden_dim), dtype, -lim1, lim1)
    w2 = jax.random.uniform(k3, (hidden_dim, dim), dtype, -lim2, lim2)
    b2 = jax.random.uniform(k4, (1, dim), dtype, -lim2, lim2)
    return w1, b1, w2, b2


def reference_f32(x, w1, b1, w2, b2):
    h = x @ w1 + b1
    h = 0.5 * h * (1.0 + jax.lax.erf(h * _INV_SQRT2))
    return h @ w2 + b2


def reference_bf16_mxu(x, w1, b1, w2, b2):
    """Same bf16-operand / f32-accumulate recipe as the kernel (tight comparison)."""
    h = jnp.dot(x.astype(jnp.bfloat16), w1.astype(jnp.bfloat16),
                preferred_element_type=jnp.float32) + b1
    h = 0.5 * h * (1.0 + jax.lax.erf(h * _INV_SQRT2))
    return jnp.dot(h.astype(jnp.bfloat16), w2.astype(jnp.bfloat16),
                   preferred_element_type=jnp.float32) + b2


if __name__ == "__main__":
    key = jax.random.PRNGKey(0)
    kx, kp, kx2, kp2 = jax.random.split(key, 4)

    # --- Main case: lane-dense shapes, 4 grid steps at block_n=512 (megacore-friendly) ----
    dim = 128
    hidden_dim_multiplier = 2
    n_nodes = 2048

    x = jax.random.normal(kx, (n_nodes, dim), jnp.float32)
    w1, b1, w2, b2 = init_params(kp, dim, hidden_dim_multiplier)

    # Hoisted: pad + bf16-cast weights once, reuse across calls.
    params, out_dim = prepare_params(w1, b1, w2, b2)
    out = jax.block_until_ready(
        feed_forward_prepared(x, *params, out_dim=out_dim, block_n=512))
    assert out.shape == (n_nodes, dim)

    ref_bf16 = reference_bf16_mxu(x, w1, b1, w2, b2)
    assert jnp.allclose(out, ref_bf16, atol=2e-3, rtol=2e-3), \
        "mismatch vs bf16-matched reference"
    ref_f32 = reference_f32(x, w1, b1, w2, b2)
    assert jnp.allclose(out, ref_f32, atol=3e-1, rtol=1e-1), \
        "mismatch vs f32 reference (beyond bf16 rounding budget)"

    # Optional fast path: tanh-approx GELU (EUP) + bf16 output (looser tolerance).
    out_fast = jax.block_until_ready(
        feed_forward_prepared(x, *params, out_dim=out_dim, block_n=512,
                              gelu_approx=True, out_dtype=jnp.bfloat16))
    assert out_fast.shape == (n_nodes, dim) and out_fast.dtype == jnp.bfloat16
    assert jnp.allclose(out_fast.astype(jnp.float32), ref_f32, atol=1e-1, rtol=1e-1), \
        "mismatch on approx-GELU / bf16-out path"

    # --- Secondary case: non-aligned shapes exercise padding + short-grid ("arbitrary") path --
    dim2 = 48
    n_nodes2 = 100
    x2 = jax.random.normal(kx2, (n_nodes2, dim2), jnp.float32)
    w1b, b1b, w2b, b2b = init_params(kp2, dim2, 1.5)
    out2 = jax.block_until_ready(feed_forward(x2, w1b, b1b, w2b, b2b))
    assert out2.shape == (n_nodes2, dim2)
    ref2 = reference_bf16_mxu(x2, w1b, b1b, w2b, b2b)
    assert jnp.allclose(out2, ref2, atol=2e-3, rtol=2e-3), \
        "mismatch vs bf16-matched reference (padded case)"

    print("KERNEL_OK")
</pallas_src>

<mosaic_0001>
module attributes {stable_mosaic.version = 11 : i64} {
  func.func @ffn_kernel(%arg0: i32, %arg1: memref<512x128xf32, #tpu.memory_space<vmem>>, %arg2: memref<128x256xbf16, #tpu.memory_space<vmem>>, %arg3: memref<1x256xf32, #tpu.memory_space<vmem>>, %arg4: memref<256x128xbf16, #tpu.memory_space<vmem>>, %arg5: memref<1x128xf32, #tpu.memory_space<vmem>>, %arg6: memref<512x128xf32, #tpu.memory_space<vmem>>) attributes {dimension_semantics = [#tpu.dimension_semantics<parallel>], iteration_bounds = array<i64: 4>, scalar_prefetch = 0 : i64, scratch_operands = 0 : i64, tpu.core_type = #tpu.core_type<tc>, window_params = [{transform_indices = @transform_0, window_bounds = array<i64: 512, 128>}, {pipeline_mode = #tpu.pipeline_mode<synchronous>, transform_indices = @transform_1, window_bounds = array<i64: 128, 256>}, {pipeline_mode = #tpu.pipeline_mode<synchronous>, transform_indices = @transform_2, window_bounds = array<i64: 1, 256>}, {pipeline_mode = #tpu.pipeline_mode<synchronous>, transform_indices = @transform_3, window_bounds = array<i64: 256, 128>}, {pipeline_mode = #tpu.pipeline_mode<synchronous>, transform_indices = @transform_4, window_bounds = array<i64: 1, 128>}, {transform_indices = @transform_5, window_bounds = array<i64: 512, 128>}]} {
    %c0 = arith.constant 0 : index
    %c0_0 = arith.constant 0 : index
    %0 = vector.load %arg1[%c0, %c0_0] : memref<512x128xf32, #tpu.memory_space<vmem>>, vector<512x128xf32>
    %1 = arith.truncf %0 : vector<512x128xf32> to vector<512x128xbf16>
    %c0_1 = arith.constant 0 : index
    %c0_2 = arith.constant 0 : index
    %2 = vector.load %arg2[%c0_1, %c0_2] : memref<128x256xbf16, #tpu.memory_space<vmem>>, vector<128x256xbf16>
    %cst = arith.constant dense<0.000000e+00> : vector<512x256xf32>
    %3 = tpu.matmul %1, %2, %cst {dimension_numbers = #tpu.dot_dimension_numbers<[1], [0], [0], [1], [0, 0, 1, 1], [], []>} : vector<512x128xbf16>, vector<128x256xbf16>, vector<512x256xf32> -> vector<512x256xf32>
    %c0_3 = arith.constant 0 : index
    %c0_4 = arith.constant 0 : index
    %4 = vector.load %arg3[%c0_3, %c0_4] : memref<1x256xf32, #tpu.memory_space<vmem>>, vector<1x256xf32>
    %5 = vector.broadcast %4 : vector<1x256xf32> to vector<512x256xf32>
    %6 = arith.addf %3, %5 : vector<512x256xf32>
    %cst_5 = arith.constant 5.000000e-01 : f32
    %7 = vector.broadcast %cst_5 : f32 to vector<512x256xf32>
    %8 = arith.mulf %7, %6 : vector<512x256xf32>
    %cst_6 = arith.constant 0.707106769 : f32
    %9 = vector.broadcast %cst_6 : f32 to vector<512x256xf32>
    %10 = arith.mulf %6, %9 : vector<512x256xf32>
    %11 = math.erf %10 : vector<512x256xf32>
    %cst_7 = arith.constant 1.000000e+00 : f32
    %12 = vector.broadcast %cst_7 : f32 to vector<512x256xf32>
    %13 = arith.addf %12, %11 : vector<512x256xf32>
    %14 = arith.mulf %8, %13 : vector<512x256xf32>
    %15 = arith.truncf %14 : vector<512x256xf32> to vector<512x256xbf16>
    %c0_8 = arith.constant 0 : index
    %c0_9 = arith.constant 0 : index
    %16 = vector.load %arg4[%c0_8, %c0_9] : memref<256x128xbf16, #tpu.memory_space<vmem>>, vector<256x128xbf16>
    %cst_10 = arith.constant dense<0.000000e+00> : vector<512x128xf32>
    %17 = tpu.matmul %15, %16, %cst_10 {dimension_numbers = #tpu.dot_dimension_numbers<[1], [0], [0], [1], [0, 0, 1, 1], [], []>} : vector<512x256xbf16>, vector<256x128xbf16>, vector<512x128xf32> -> vector<512x128xf32>
    %c0_11 = arith.constant 0 : index
    %c0_12 = arith.constant 0 : index
    %18 = vector.load %arg5[%c0_11, %c0_12] : memref<1x128xf32, #tpu.memory_space<vmem>>, vector<1x128xf32>
    %19 = vector.broadcast %18 : vector<1x128xf32> to vector<512x128xf32>
    %20 = arith.addf %17, %19 : vector<512x128xf32>
    %c0_13 = arith.constant 0 : index
    %c0_14 = arith.constant 0 : index
    %21 = vector.load %arg6[%c0_13, %c0_14] : memref<512x128xf32, #tpu.memory_space<vmem>>, vector<512x128xf32>
    tpu.vector_store %arg6[%c0_13, %c0_14], %20 {strides = array<i32>} : memref<512x128xf32, #tpu.memory_space<vmem>>, vector<512x128xf32>,
    return
  }
  func.func @transform_0(%arg0: i32) -> (i32, i32) {
    %c0_i32 = arith.constant 0 : i32
    %c0_i32_0 = arith.constant 0 : i32
    return %arg0, %c0_i32 : i32, i32
  }
  func.func @transform_1(%arg0: i32) -> (i32, i32) {
    %c0_i32 = arith.constant 0 : i32
    %c0_i32_0 = arith.constant 0 : i32
    %c0_i32_1 = arith.constant 0 : i32
    return %c0_i32, %c0_i32_0 : i32, i32
  }
  func.func @transform_2(%arg0: i32) -> (i32, i32) {
    %c0_i32 = arith.constant 0 : i32
    %c0_i32_0 = arith.constant 0 : i32
    %c0_i32_1 = arith.constant 0 : i32
    return %c0_i32, %c0_i32_0 : i32, i32
  }
  func.func @transform_3(%arg0: i32) -> (i32, i32) {
    %c0_i32 = arith.constant 0 : i32
    %c0_i32_0 = arith.constant 0 : i32
    %c0_i32_1 = arith.constant 0 : i32
    return %c0_i32, %c0_i32_0 : i32, i32
  }
  func.func @transform_4(%arg0: i32) -> (i32, i32) {
    %c0_i32 = arith.constant 0 : i32
    %c0_i32_0 = arith.constant 0 : i32
    %c0_i32_1 = arith.constant 0 : i32
    return %c0_i32, %c0_i32_0 : i32, i32
  }
  func.func @transform_5(%arg0: i32) -> (i32, i32) {
    %c0_i32 = arith.constant 0 : i32
    %c0_i32_0 = arith.constant 0 : i32
    return %arg0, %c0_i32 : i32, i32
  }
}

</mosaic_0001>

<llo_original>
// kernel: feed_forward_prepared.1
$region0: #{feed_forward_prepared.1}
  #allocation0 [shape = 'u32[]', space=smem, size = 0x4, offset = 0x4, fixed_abs, tag = 'smem constant byte address 0x4 - core index']
  #allocation1 [shape = 'u32[144,128]{1,0:T(1,128)}', space=vmem, size = 0x12000, scoped, tag = 'internal scratch']
  %s0 = inlined_call_operand.hbm [shape: f32[2048,128], index: 0, kind: input, shape index: {}]
  %s1 = inlined_call_operand.hbm [shape: bf16[128,256], index: 1, kind: input, shape index: {}]
  %s2 = inlined_call_operand.vmem [shape: f32[1,256], index: 2, kind: input, shape index: {}]
  %s3 = inlined_call_operand.hbm [shape: bf16[256,128], index: 3, kind: input, shape index: {}]
  %s4 = inlined_call_operand.vmem [shape: f32[1,128], index: 4, kind: input, shape index: {}]
  %s5 = inlined_call_operand.hbm [shape: f32[2048,128], index: 5, kind: output, shape index: {}]
  %s6 = sld [smem:[#allocation0]]
  $region65: #{feed_forward_prepared.1} parent=0
    _
  %s8 = ssub.s32 1, %s6
  %s9 = scalar_select 0, %s8, %s6
  $region1: #{feed_forward_prepared.1} parent=0
    #allocation2 [shape = 'u8[524288]{0}', space=vmem, size = 0x80000, scoped, tag = 'input window, operand 0']
    #allocation3 [shape = 's32[2]{0}', space=sflag, size = 0x8, scoped, tag = 'scoped memory for feed_forward_prepared.1']
    #allocation4 [shape = 's32[2]{0}', space=sflag, size = 0x8, scoped, tag = 'scoped memory for feed_forward_prepared.1']
    #allocation5 [shape = 'u8[65536]{0}', space=vmem, size = 0x10000, scoped, tag = 'input window, operand 1, single buffered']
    #allocation6 [shape = 's32[1]{0}', space=sflag, size = 0x4, scoped, tag = 'scoped memory for feed_forward_prepared.1']
    #allocation7 [shape = 'u8[65536]{0}', space=vmem, size = 0x10000, scoped, tag = 'input window, operand 3, single buffered']
    #allocation8 [shape = 'u8[524288]{0}', space=vmem, size = 0x80000, scoped, tag = 'output window, operand 0']
    %10 = vsyncpa [#allocation3], 0
    %s11 = scalar_lea.sflag [#allocation3], 1
    %12 = vsyncpa %s11, 0
    %13 = vsyncpa [#allocation6], 0
    %14 = vsyncpa [#allocation4], 0
    %s15 = scalar_lea.sflag [#allocation4], 1
    %16 = vsyncpa %s15, 0
    loop: start=0, step=1, limit=6
    $region2: #{feed_forward_prepared.1} parent=1 // loop_pre_header
      _
    $region3: #{feed_forward_prepared.1} parent=1 // loop_header
      %s18 = sphi 0, %s22
      %p19 = scmp.ge.s32.totalorder %s18, 6
      %s28 = sphi 0, %s30
      %s31 = sphi 0, %s28
      %s32 = sphi 0, %s31
      %s48 = sphi 0, %s32
      %s52 = sphi 0, %s52
      %s54 = sphi 0, %s52
      %s55 = sphi 0, %s54
      %s69 = sphi 0, %s55
      %s73 = sphi 0, %s73
      %s75 = sphi 0, %s73
      %s76 = sphi 0, %s75
      %s90 = sphi 0, %s76
      %s94 = sphi 0, %s94
      %s96 = sphi 0, %s94
      %s97 = sphi 0, %s96
      %s111 = sphi 0, %s97
      %s115 = sphi 0, %s115
      %s117 = sphi 0, %s115
      %s118 = sphi 0, %s117
      %s132 = sphi 0, %s118
      %s138 = sphi 0, %s140
      %s141 = sphi 0, %s138
      %s142 = sphi 0, %s141
      %s158 = sphi 0, %s142
    $region4: #{feed_forward_prepared.1} parent=1 // loop_header_branch
      %21 = sbr.rel (%p19) target = $region8
    $region5: #{feed_forward_prepared.1} parent=1 // loop_body
      %s23 = ssub.s32 %s18, 1
      %s24 = ssub.s32 %s18, 2
      %s25 = sadd.s32 %s18, 1
      %s26 = ssub.s32 %s18, %s25
      %p27 = scmp.eq.s32.totalorder %s26, 0
      %s29 = sadd.s32 %s28, 1
      %s30 = scalar_select %p27, %s28, %s29
      %p33 = pneg %p27
      %p34 = scmp.eq.s32.totalorder %s18, 3
      %p35 = por %p33, %p34
      %p36 = scmp.ne.s32.totalorder %s28, %s31
      %p37 = scmp.eq.s32.totalorder %s18, 0
      %p38 = por %p36, %p37
      %p39 = scmp.ne.s32.totalorder %s28, %s31
      %p40 = scmp.eq.s32.totalorder %s23, 3
      %p41 = por %p39, %p40
      %p42 = scmp.ne.s32.totalorder %s31, %s32
      %p43 = scmp.eq.s32.totalorder %s23, 0
      %p44 = por %p42, %p43
      %p45 = scmp.ne.s32.totalorder %s31, %s32
      %p46 = scmp.eq.s32.totalorder %s24, 3
      %p47 = por %p45, %p46
      %p49 = scmp.ne.s32.totalorder %s32, %s48
      %p50 = scmp.eq.s32.totalorder %s24, 0
      %p51 = por %p49, %p50
      %s53 = sadd.s32 %s52, 1
      %p56 = scmp.eq.s32.totalorder %s18, 3
      %p57 = scmp.ne.s32.totalorder %s52, %s54
      %p58 = scmp.eq.s32.totalorder %s18, 0
      %p59 = por %p57, %p58
      %p60 = scmp.ne.s32.totalorder %s52, %s54
      %p61 = scmp.eq.s32.totalorder %s23, 3
      %p62 = por %p60, %p61
      %p63 = scmp.ne.s32.totalorder %s54, %s55
      %p64 = scmp.eq.s32.totalorder %s23, 0
      %p65 = por %p63, %p64
      %p66 = scmp.ne.s32.totalorder %s54, %s55
      %p67 = scmp.eq.s32.totalorder %s24, 3
      %p68 = por %p66, %p67
      %p70 = scmp.ne.s32.totalorder %s55, %s69
      %p71 = scmp.eq.s32.totalorder %s24, 0
      %p72 = por %p70, %p71
      %s74 = sadd.s32 %s73, 1
      %p77 = scmp.eq.s32.totalorder %s18, 3
      %p78 = scmp.ne.s32.totalorder %s73, %s75
      %p79 = scmp.eq.s32.totalorder %s18, 0
      %p80 = por %p78, %p79
      %p81 = scmp.ne.s32.totalorder %s73, %s75
      %p82 = scmp.eq.s32.totalorder %s23, 3
      %p83 = por %p81, %p82
      %p84 = scmp.ne.s32.totalorder %s75, %s76
      %p85 = scmp.eq.s32.totalorder %s23, 0
      %p86 = por %p84, %p85
      %p87 = scmp.ne.s32.totalorder %s75, %s76
      %p88 = scmp.eq.s32.totalorder %s24, 3
      %p89 = por %p87, %p88
      %p91 = scmp.ne.s32.totalorder %s76, %s90
      %p92 = scmp.eq.s32.totalorder %s24, 0
      %p93 = por %p91, %p92
      %s95 = sadd.s32 %s94, 1
      %p98 = scmp.eq.s32.totalorder %s18, 3
      %p99 = scmp.ne.s32.totalorder %s94, %s96
      %p100 = scmp.eq.s32.totalorder %s18, 0
      %p101 = por %p99, %p100
      %p102 = scmp.ne.s32.totalorder %s94, %s96
      %p103 = scmp.eq.s32.totalorder %s23, 3
      %p104 = por %p102, %p103
      %p105 = scmp.ne.s32.totalorder %s96, %s97
      %p106 = scmp.eq.s32.totalorder %s23, 0
      %p107 = por %p105, %p106
      %p108 = scmp.ne.s32.totalorder %s96, %s97
      %p109 = scmp.eq.s32.totalorder %s24, 3
      %p110 = por %p108, %p109
      %p112 = scmp.ne.s32.totalorder %s97, %s111
      %p113 = scmp.eq.s32.totalorder %s24, 0
      %p114 = por %p112, %p113
      %s116 = sadd.s32 %s115, 1
      %p119 = scmp.eq.s32.totalorder %s18, 3
      %p120 = scmp.ne.s32.totalorder %s115, %s117
      %p121 = scmp.eq.s32.totalorder %s18, 0
      %p122 = por %p120, %p121
      %p123 = scmp.ne.s32.totalorder %s115, %s117
      %p124 = scmp.eq.s32.totalorder %s23, 3
      %p125 = por %p123, %p124
      %p126 = scmp.ne.s32.totalorder %s117, %s118
      %p127 = scmp.eq.s32.totalorder %s23, 0
      %p128 = por %p126, %p127
      %p129 = scmp.ne.s32.totalorder %s117, %s118
      %p130 = scmp.eq.s32.totalorder %s24, 3
      %p131 = por %p129, %p130
      %p133 = scmp.ne.s32.totalorder %s118, %s132
      %p134 = scmp.eq.s32.totalorder %s24, 0
      %p135 = por %p133, %p134
      %s136 = ssub.s32 %s18, %s25
      %p137 = scmp.eq.s32.totalorder %s136, 0
      %s139 = sadd.s32 %s138, 1
      %s140 = scalar_select %p137, %s138, %s139
      %p143 = pneg %p137
      %p144 = scmp.eq.s32.totalorder %s18, 3
      %p145 = por %p143, %p144
      %p146 = scmp.ne.s32.totalorder %s138, %s141
      %p147 = scmp.eq.s32.totalorder %s18, 0
      %p148 = por %p146, %p147
      %p149 = scmp.ne.s32.totalorder %s138, %s141
      %p150 = scmp.eq.s32.totalorder %s23, 3
      %p151 = por %p149, %p150
      %p152 = scmp.ne.s32.totalorder %s141, %s142
      %p153 = scmp.eq.s32.totalorder %s23, 0
      %p154 = por %p152, %p153
      %p155 = scmp.ne.s32.totalorder %s141, %s142
      %p156 = scmp.eq.s32.totalorder %s24, 3
      %p157 = por %p155, %p156
      %p159 = scmp.ne.s32.totalorder %s142, %s158
      %p160 = scmp.eq.s32.totalorder %s24, 0
      %p161 = por %p159, %p160
      %p162 = scmp.le.s32.totalorder 1, %s18
      %p163 = scmp.lt.s32.totalorder %s18, 5
      %p164 = pnand %p162, %p163
      %p165 = pneg %p164
      // Predicated region
      $region9: #{feed_forward_prepared.1} parent=5 // pred_check
        _
      $region10: #{feed_forward_prepared.1} parent=5 // pred_check_branch
        %167 = sbr.rel (%p164) target = $region12
      $region11: #{feed_forward_prepared.1} parent=5 // pred_region
        %s168 = ssub.s32 %s18, 1
        // Predicated region
        $region13: #{feed_forward_prepared.1} parent=11 // pred_check
          %p169 = pneg %p65
        $region14: #{feed_forward_prepared.1} parent=11 // pred_check_branch
          %171 = sbr.rel (%p169) target = $region16
        $region15: #{feed_forward_prepared.1} parent=11 // pred_region
          %s173 = ssub.s32 2048, 2048
          %174 = vsyncadd [#allocation6], %s173
          %s175 = sshll.u32 [#allocation5], 4
          %s176 = int_to_ptr.vmem [resolvable:$true] %s175
          %181 = dma.hbm_to_vmem [thread:$0]  %s1, 2048, %s176, [#allocation6], 128, 128, 8
        $region16: #{feed_forward_prepared.1} parent=11 // pred_fallthru
          _
        // Predicated region
        $region17: #{feed_forward_prepared.1} parent=11 // pred_check
          %p182 = pneg %p86
        $region18: #{feed_forward_prepared.1} parent=11 // pred_check_branch
          %184 = sbr.rel (%p182) target = $region20
        $region19: #{feed_forward_prepared.1} parent=11 // pred_region
          _
        $region20: #{feed_forward_prepared.1} parent=11 // pred_fallthru
          _
        // Predicated region
        $region21: #{feed_forward_prepared.1} parent=11 // pred_check
          %p185 = pneg %p107
        $region22: #{feed_forward_prepared.1} parent=11 // pred_check_branch
          %187 = sbr.rel (%p185) target = $region24
        $region23: #{feed_forward_prepared.1} parent=11 // pred_region
          %s189 = ssub.s32 2048, 2048
          %190 = vsyncadd [#allocation6], %s189
          %s191 = sshll.u32 [#allocation7], 4
          %s192 = int_to_ptr.vmem [resolvable:$true] %s191
          %197 = dma.hbm_to_vmem [thread:$0]  %s3, 2048, %s192, [#allocation6], 64, 64, 4
        $region24: #{feed_forward_prepared.1} parent=11 // pred_fallthru
          _
        // Predicated region
        $region25: #{feed_forward_prepared.1} parent=11 // pred_check
          %p198 = pneg %p128
        $region26: #{feed_forward_prepared.1} parent=11 // pred_check_branch
          %200 = sbr.rel (%p198) target = $region28
        $region27: #{feed_forward_prepared.1} parent=11 // pred_region
          _
        $region28: #{feed_forward_prepared.1} parent=11 // pred_fallthru
          _
      $region12: #{feed_forward_prepared.1} parent=5 // pred_fallthru
        _
      %p201 = scmp.lt.s32.totalorder %s18, 4
      // Predicated region
      $region29: #{feed_forward_prepared.1} parent=5 // pred_check
        %p202 = pneg %p201
      $region30: #{feed_forward_prepared.1} parent=5 // pred_check_branch
        %204 = sbr.rel (%p202) target = $region32
      $region31: #{feed_forward_prepared.1} parent=5 // pred_region
        // Predicated region
        $region33: #{feed_forward_prepared.1} parent=31 // pred_check
          %p205 = pneg %p38
        $region34: #{feed_forward_prepared.1} parent=31 // pred_check_branch
          %207 = sbr.rel (%p205) target = $region36
        $region35: #{feed_forward_prepared.1} parent=31 // pred_region
          %s208 = sand.u32 %s28, 1
          %s209 = scalar_lea.sflag [#allocation3], %s208
          %s210 = sand.u32 %s28, 1
          %s211 = smul.addr %s210, 512
          %s212 = scalar_lea.vmem [#allocation2], %s211
          %s213 = smul.u32 64, %s18
          %s215 = ssub.s32 8192, 8192
          %216 = vsyncadd %s209, %s215
          %s217 = smul.addr %s213, 128
          %s218 = scalar_lea.hbm %s0, %s217
          %s219 = sshll.u32 %s212, 4
          %s220 = int_to_ptr.vmem [resolvable:$true] %s219
          %225 = dma.hbm_to_vmem [thread:$0]  %s218, 8192, %s220, %s209, 128, 128, 8
        $region36: #{feed_forward_prepared.1} parent=31 // pred_fallthru
          _
      $region32: #{feed_forward_prepared.1} parent=5 // pred_fallthru
        _
      %p226 = scmp.le.s32.totalorder 1, %s18
      %p227 = scmp.lt.s32.totalorder %s18, 5
      %p228 = pnand %p226, %p227
      %p229 = pneg %p228
      // Predicated region
      $region37: #{feed_forward_prepared.1} parent=5 // pred_check
        _
      $region38: #{feed_forward_prepared.1} parent=5 // pred_check_branch
        %231 = sbr.rel (%p228) target = $region40
      $region39: #{feed_forward_prepared.1} parent=5 // pred_region
        %s232 = ssub.s32 %s18, 1
        %s233 = sand.u32 %s31, 1
        %s234 = scalar_lea.sflag [#allocation3], %s233
        %s235 = sand.u32 %s31, 1
        %s236 = smul.addr %s235, 512
        %s237 = scalar_lea.vmem [#allocation2], %s236
        // Predicated region
        $region41: #{feed_forward_prepared.1} parent=39 // pred_check
          %p238 = pneg %p44
        $region42: #{feed_forward_prepared.1} parent=39 // pred_check_branch
          %240 = sbr.rel (%p238) target = $region44
        $region43: #{feed_forward_prepared.1} parent=39 // pred_region
          %241 = dma.done %s234, 8192
        $region44: #{feed_forward_prepared.1} parent=39 // pred_fallthru
          _
        // Predicated region
        $region45: #{feed_forward_prepared.1} parent=39 // pred_check
          %p242 = pneg %p65
        $region46: #{feed_forward_prepared.1} parent=39 // pred_check_branch
          %244 = sbr.rel (%p242) target = $region48
        $region47: #{feed_forward_prepared.1} parent=39 // pred_region
          %245 = dma.done [#allocation6], 2048
        $region48: #{feed_forward_prepared.1} parent=39 // pred_fallthru
          _
        // Predicated region
        $region49: #{feed_forward_prepared.1} parent=39 // pred_check
          %p246 = pneg %p107
        $region50: #{feed_forward_prepared.1} parent=39 // pred_check_branch
          %248 = sbr.rel (%p246) target = $region52
        $region51: #{feed_forward_prepared.1} parent=39 // pred_region
          %249 = dma.done [#allocation6], 2048
        $region52: #{feed_forward_prepared.1} parent=39 // pred_fallthru
          _
        %s250 = sand.u32 %s31, 1
        %s251 = scalar_lea.sflag [#allocation3], %s250
        %s252 = sand.u32 %s31, 1
        %s253 = smul.addr %s252, 512
        %s254 = scalar_lea.vmem [#allocation2], %s253
        %p255 = pneg %p44
        %p256 = pneg %p41
        %p257 = pneg %p65
        %p258 = pneg %p62
        %p259 = pneg %p86
        %p260 = pneg %p83
        %p261 = pneg %p107
        %p262 = pneg %p104
        %p263 = pneg %p128
        %p264 = pneg %p125
        %p265 = pneg %p154
        %p266 = pneg %p151
        %s267 = sand.u32 %s141, 1
        %s268 = scalar_lea.sflag [#allocation4], %s267
        %s269 = sand.u32 %s141, 1
        %s270 = smul.addr %s269, 512
        %s271 = scalar_lea.vmem [#allocation8], %s270
        %s272 = smul.u32 64, %s23
        %s273 = smul.u32 64, %s23
        %v275 = vld [vmem:[%s237] sm:$0xff]
        %v276 = vld [vmem:[%s237 + $0x8] sm:$0xff]
        %v277 = vld [vmem:[%s237 + $0x10] sm:$0xff]
        %v278 = vld [vmem:[%s237 + $0x18] sm:$0xff]
        %v279 = vld [vmem:[%s237 + $0x20] sm:$0xff]
        %v280 = vld [vmem:[%s237 + $0x28] sm:$0xff]
        %v281 = vld [vmem:[%s237 + $0x30] sm:$0xff]
        %v282 = vld [vmem:[%s237 + $0x38] sm:$0xff]
        %v283 = vld [vmem:[%s237 + $0x40] sm:$0xff]
        %v284 = vld [vmem:[%s237 + $0x48] sm:$0xff]
        %v285 = vld [vmem:[%s237 + $0x50] sm:$0xff]
        %v286 = vld [vmem:[%s237 + $0x58] sm:$0xff]
        %v287 = vld [vmem:[%s237 + $0x60] sm:$0xff]
        %v288 = vld [vmem:[%s237 + $0x68] sm:$0xff]
        %v289 = vld [vmem:[%s237 + $0x70] sm:$0xff]
        %v290 = vld [vmem:[%s237 + $0x78] sm:$0xff]
        %v291 = vld [vmem:[%s237 + $0x80] sm:$0xff]
        %v292 = vld [vmem:[%s237 + $0x88] sm:$0xff]
        %v293 = vld [vmem:[%s237 + $0x90] sm:$0xff]
        %v294 = vld [vmem:[%s237 + $0x98] sm:$0xff]
        %v295 = vld [vmem:[%s237 + $0xa0] sm:$0xff]
        %v296 = vld [vmem:[%s237 + $0xa8] sm:$0xff]
        %v297 = vld [vmem:[%s237 + $0xb0] sm:$0xff]
        %v298 = vld [vmem:[%s237 + $0xb8] sm:$0xff]
        %v299 = vld [vmem:[%s237 + $0xc0] sm:$0xff]
        %v300 = vld [vmem:[%s237 + $0xc8] sm:$0xff]
        %v301 = vld [vmem:[%s237 + $0xd0] sm:$0xff]
        %v302 = vld [vmem:[%s237 + $0xd8] sm:$0xff]
        %v303 = vld [vmem:[%s237 + $0xe0] sm:$0xff]
        %v304 = vld [vmem:[%s237 + $0xe8] sm:$0xff]
        %v305 = vld [vmem:[%s237 + $0xf0] sm:$0xff]
        %v306 = vld [vmem:[%s237 + $0xf8] sm:$0xff]
        %v307 = vld [vmem:[%s237 + $0x100] sm:$0xff]
        %v308 = vld [vmem:[%s237 + $0x108] sm:$0xff]
        %v309 = vld [vmem:[%s237 + $0x110] sm:$0xff]
        %v310 = vld [vmem:[%s237 + $0x118] sm:$0xff]
        %v311 = vld [vmem:[%s237 + $0x120] sm:$0xff]
        %v312 = vld [vmem:[%s237 + $0x128] sm:$0xff]
        %v313 = vld [vmem:[%s237 + $0x130] sm:$0xff]
        %v314 = vld [vmem:[%s237 + $0x138] sm:$0xff]
        %v315 = vld [vmem:[%s237 + $0x140] sm:$0xff]
        %v316 = vld [vmem:[%s237 + $0x148] sm:$0xff]
        %v317 = vld [vmem:[%s237 + $0x150] sm:$0xff]
        %v318 = vld [vmem:[%s237 + $0x158] sm:$0xff]
        %v319 = vld [vmem:[%s237 + $0x160] sm:$0xff]
        %v320 = vld [vmem:[%s237 + $0x168] sm:$0xff]
        %v321 = vld [vmem:[%s237 + $0x170] sm:$0xff]
        %v322 = vld [vmem:[%s237 + $0x178] sm:$0xff]
        %v323 = vld [vmem:[%s237 + $0x180] sm:$0xff]
        %v324 = vld [vmem:[%s237 + $0x188] sm:$0xff]
        %v325 = vld [vmem:[%s237 + $0x190] sm:$0xff]
        %v326 = vld [vmem:[%s237 + $0x198] sm:$0xff]
        %v327 = vld [vmem:[%s237 + $0x1a0] sm:$0xff]
        %v328 = vld [vmem:[%s237 + $0x1a8] sm:$0xff]
        %v329 = vld [vmem:[%s237 + $0x1b0] sm:$0xff]
        %v330 = vld [vmem:[%s237 + $0x1b8] sm:$0xff]
        %v331 = vld [vmem:[%s237 + $0x1c0] sm:$0xff]
        %v332 = vld [vmem:[%s237 + $0x1c8] sm:$0xff]
        %v333 = vld [vmem:[%s237 + $0x1d0] sm:$0xff]
        %v334 = vld [vmem:[%s237 + $0x1d8] sm:$0xff]
        %v335 = vld [vmem:[%s237 + $0x1e0] sm:$0xff]
        %v336 = vld [vmem:[%s237 + $0x1e8] sm:$0xff]
        %v337 = vld [vmem:[%s237 + $0x1f0] sm:$0xff]
        %v338 = vld [vmem:[%s237 + $0x1f8] sm:$0xff]
        %v339 = vpack.c.bf16 %v276, %v275
        %v340 = vpack.c.bf16 %v278, %v277
        %v341 = vpack.c.bf16 %v280, %v279
        %v342 = vpack.c.bf16 %v282, %v281
        %v343 = vpack.c.bf16 %v284, %v283
        %v344 = vpack.c.bf16 %v286, %v285
        %v345 = vpack.c.bf16 %v288, %v287
        %v346 = vpack.c.bf16 %v290, %v289
        %v347 = vpack.c.bf16 %v292, %v291
        %v348 = vpack.c.bf16 %v294, %v293
        %v349 = vpack.c.bf16 %v296, %v295
        %v350 = vpack.c.bf16 %v298, %v297
        %v351 = vpack.c.bf16 %v300, %v299
        %v352 = vpack.c.bf16 %v302, %v301
        %v353 = vpack.c.bf16 %v304, %v303
        %v354 = vpack.c.bf16 %v306, %v305
        %v355 = vpack.c.bf16 %v308, %v307
        %v356 = vpack.c.bf16 %v310, %v309
        %v357 = vpack.c.bf16 %v312, %v311
        %v358 = vpack.c.bf16 %v314, %v313
        %v359 = vpack.c.bf16 %v316, %v315
        %v360 = vpack.c.bf16 %v318, %v317
        %v361 = vpack.c.bf16 %v320, %v319
        %v362 = vpack.c.bf16 %v322, %v321
        %v363 = vpack.c.bf16 %v324, %v323
        %v364 = vpack.c.bf16 %v326, %v325
        %v365 = vpack.c.bf16 %v328, %v327
        %v366 = vpack.c.bf16 %v330, %v329
        %v367 = vpack.c.bf16 %v332, %v331
        %v368 = vpack.c.bf16 %v334, %v333
        %v369 = vpack.c.bf16 %v336, %v335
        %v370 = vpack.c.bf16 %v338, %v337
        %v371 = vld [vmem:[#allocation5] sm:$0xff]
        %v372 = vld [vmem:[#allocation5 + $0x8] sm:$0xff]
        %v373 = vld [vmem:[#allocation5 + $0x10] sm:$0xff]
        %v374 = vld [vmem:[#allocation5 + $0x18] sm:$0xff]
        %v375 = vld [vmem:[#allocation5 + $0x20] sm:$0xff]
        %v376 = vld [vmem:[#allocation5 + $0x28] sm:$0xff]
        %v377 = vld [vmem:[#allocation5 + $0x30] sm:$0xff]
        %v378 = vld [vmem:[#allocation5 + $0x38] sm:$0xff]
        %v379 = vld [vmem:[#allocation5 + $0x40] sm:$0xff]
        %v380 = vld [vmem:[#allocation5 + $0x48] sm:$0xff]
        %v381 = vld [vmem:[#allocation5 + $0x50] sm:$0xff]
        %v382 = vld [vmem:[#allocation5 + $0x58] sm:$0xff]
        %v383 = vld [vmem:[#allocation5 + $0x60] sm:$0xff]
        %v384 = vld [vmem:[#allocation5 + $0x68] sm:$0xff]
        %v385 = vld [vmem:[#allocation5 + $0x70] sm:$0xff]
        %v386 = vld [vmem:[#allocation5 + $0x78] sm:$0xff]
        %v387 = vld [vmem:[%s2] sm:$0x3]
        %v389 = vlaneseq
        %v390 = vshrl.u32 %v389, 7
        %v391 = vsub.s32 0, %v390
        %v392 = vrot.slane %v387, %v391
        %v393 = vlaneseq
        %v394 = vshrl.u32 %v393, 7
        %v395 = vsub.s32 1, %v394
        %v396 = vrot.slane %v387, %v395
        %v415 = vunpack.c.l.b16 %v371
        %v416 = vunpack.c.h.b16 %v371
        %v417 = vunpack.c.l.b16 %v372
        %v418 = vunpack.c.h.b16 %v372
        %v419 = vunpack.c.l.b16 %v373
        %v420 = vunpack.c.h.b16 %v373
        %v421 = vunpack.c.l.b16 %v374
        %v422 = vunpack.c.h.b16 %v374
        %v423 = vunpack.c.l.b16 %v375
        %v424 = vunpack.c.h.b16 %v375
        %v425 = vunpack.c.l.b16 %v376
        %v426 = vunpack.c.h.b16 %v376
        %v427 = vunpack.c.l.b16 %v377
        %v428 = vunpack.c.h.b16 %v377
        %v429 = vunpack.c.l.b16 %v378
        %v430 = vunpack.c.h.b16 %v378
        %v431 = vunpack.c.l.b16 %v379
        %v432 = vunpack.c.h.b16 %v379
        %v433 = vunpack.c.l.b16 %v380
        %v434 = vunpack.c.h.b16 %v380
        %v435 = vunpack.c.l.b16 %v381
        %v436 = vunpack.c.h.b16 %v381
        %v437 = vunpack.c.l.b16 %v382
        %v438 = vunpack.c.h.b16 %v382
        %v439 = vunpack.c.l.b16 %v383
        %v440 = vunpack.c.h.b16 %v383
        %v441 = vunpack.c.l.b16 %v384
        %v442 = vunpack.c.h.b16 %v384
        %v443 = vunpack.c.l.b16 %v385
        %v444 = vunpack.c.h.b16 %v385
        %v445 = vunpack.c.l.b16 %v386
        %v446 = vunpack.c.h.b16 %v386
        %v447 = vpack.c.b16 %v417, %v415
        %v448 = vpack.c.b16 %v418, %v416
        %v449 = vpack.c.b16 %v421, %v419
        %v450 = vpack.c.b16 %v422, %v420
        %v451 = vpack.c.b16 %v425, %v423
        %v452 = vpack.c.b16 %v426, %v424
        %v453 = vpack.c.b16 %v429, %v427
        %v454 = vpack.c.b16 %v430, %v428
        %v455 = vpack.c.b16 %v433, %v431
        %v456 = vpack.c.b16 %v434, %v432
        %v457 = vpack.c.b16 %v437, %v435
        %v458 = vpack.c.b16 %v438, %v436
        %v459 = vpack.c.b16 %v441, %v439
        %v460 = vpack.c.b16 %v442, %v440
        %v461 = vpack.c.b16 %v445, %v443
        %v462 = vpack.c.b16 %v446, %v444
        %479 = vmatprep.subr.bf16.mxu0 %v448
        %480 = vmatpush1.bf16.msra.mxu0 %v447
        %481 = vmatprep.subr.bf16.mxu0 %v450
        %482 = vmatpush1.bf16.msra.mxu0 %v449
        %483 = vmatprep.subr.bf16.mxu0 %v452
        %484 = vmatpush1.bf16.msra.mxu0 %v451
        %485 = vmatprep.subr.bf16.mxu0 %v454
        %486 = vmatpush1.bf16.msra.mxu0 %v453
        %487 = vmatprep.subr.bf16.mxu0 %v456
        %488 = vmatpush1.bf16.msra.mxu0 %v455
        %489 = vmatprep.subr.bf16.mxu0 %v458
        %490 = vmatpush1.bf16.msra.mxu0 %v457
        %491 = vmatprep.subr.bf16.mxu0 %v460
        %492 = vmatpush1.bf16.msra.mxu0 %v459
        %493 = vmatprep.subr.bf16.mxu0 %v462
        %494 = vmatpush1.bf16.msra.mxu0 %v461
        %495 = vmatprep.subr.bf16.mxu0 0
        %496 = vmatpush1.bf16.msra.mxu0 0
        %497 = vmatprep.subr.bf16.mxu0 0
        %498 = vmatpush1.bf16.msra.mxu0 0
        %499 = vmatprep.subr.bf16.mxu0 0
        %500 = vmatpush1.bf16.msra.mxu0 0
        %501 = vmatprep.subr.bf16.mxu0 0
        %502 = vmatpush1.bf16.msra.mxu0 0
        %503 = vmatprep.subr.bf16.mxu0 0
        %504 = vmatpush1.bf16.msra.mxu0 0
        %505 = vmatprep.subr.bf16.mxu0 0
        %506 = vmatpush1.bf16.msra.mxu0 0
        %507 = vmatprep.subr.bf16.mxu0 0
        %508 = vmatpush1.bf16.msra.mxu0 0
        %509 = vmatprep.subr.bf16.mxu0 0
        %510 = vmatpush1.bf16.msra.mxu0 0
        %511 = vmatprep.mubr.bf16.mxu0 0
        %512 = vmatmul.mubr.bf16.gmra.mrb[0].mxu0 %v339
        %v513 = vpop.f32.mrb[0].mxu0
        %v514 = vadd.f32 %v392, %v513
        %v515 = vpop.f32.mrb[0].mxu0
        %v516 = vadd.f32 %v396, %v515
        %v517 = vpop.f32.mrb[0].mxu0
        %v518 = vadd.f32 %v392, %v517
        %v519 = vpop.f32.mrb[0].mxu0
        %v520 = vadd.f32 %v396, %v519
        %521 = vmatprep.mubr.bf16.mxu0 0
        %522 = vmatmul.mubr.bf16.gmra.mrb[0].mxu0 %v340
        %v523 = vpop.f32.mrb[0].mxu0
        %v524 = vadd.f32 %v392, %v523
        %v525 = vpop.f32.mrb[0].mxu0
        %v526 = vadd.f32 %v396, %v525
        %v527 = vpop.f32.mrb[0].mxu0
        %v528 = vadd.f32 %v392, %v527
        %v529 = vpop.f32.mrb[0].mxu0
        %v530 = vadd.f32 %v396, %v529
        %531 = vmatprep.mubr.bf16.mxu0 0
        %532 = vmatmul.mubr.bf16.gmra.mrb[0].mxu0 %v341
        %v533 = vpop.f32.mrb[0].mxu0
        %v534 = vadd.f32 %v392, %v533
        %v535 = vpop.f32.mrb[0].mxu0
        %v536 = vadd.f32 %v396, %v535
        %v537 = vpop.f32.mrb[0].mxu0
        %v538 = vadd.f32 %v392, %v537
        %v539 = vpop.f32.mrb[0].mxu0
        %v540 = vadd.f32 %v396, %v539
        %541 = vmatprep.mubr.bf16.mxu0 0
        %542 = vmatmul.mubr.bf16.gmra.mrb[0].mxu0 %v342
        %v543 = vpop.f32.mrb[0].mxu0
        %v544 = vadd.f32 %v392, %v543
        %v545 = vpop.f32.mrb[0].mxu0
        %v546 = vadd.f32 %v396, %v545
        %v547 = vpop.f32.mrb[0].mxu0
        %v548 = vadd.f32 %v392, %v547
        %v549 = vpop.f32.mrb[0].mxu0
        %v550 = vadd.f32 %v396, %v549
        %551 = vmatprep.mubr.bf16.mxu0 0
        %552 = vmatmul.mubr.bf16.gmra.mrb[0].mxu0 %v343
        %v553 = vpop.f32.mrb[0].mxu0
        %v554 = vadd.f32 %v392, %v553
        %v555 = vpop.f32.mrb[0].mxu0
        %v556 = vadd.f32 %v396, %v555
        %v557 = vpop.f32.mrb[0].mxu0
        %v558 = vadd.f32 %v392, %v557
        %v559 = vpop.f32.mrb[0].mxu0
        %v560 = vadd.f32 %v396, %v559
        %561 = vmatprep.mubr.bf16.mxu0 0
        %562 = vmatmul.mubr.bf16.gmra.mrb[0].mxu0 %v344
        %v563 = vpop.f32.mrb[0].mxu0
        %v564 = vadd.f32 %v392, %v563
        %v565 = vpop.f32.mrb[0].mxu0
        %v566 = vadd.f32 %v396, %v565
        %v567 = vpop.f32.mrb[0].mxu0
        %v568 = vadd.f32 %v392, %v567
        %v569 = vpop.f32.mrb[0].mxu0
        %v570 = vadd.f32 %v396, %v569
        %571 = vmatprep.mubr.bf16.mxu0 0
        %572 = vmatmul.mubr.bf16.gmra.mrb[0].mxu0 %v345
        %v573 = vpop.f32.mrb[0].mxu0
        %v574 = vadd.f32 %v392, %v573
        %v575 = vpop.f32.mrb[0].mxu0
        %v576 = vadd.f32 %v396, %v575
        %v577 = vpop.f32.mrb[0].mxu0
        %v578 = vadd.f32 %v392, %v577
        %v579 = vpop.f32.mrb[0].mxu0
        %v580 = vadd.f32 %v396, %v579
        %581 = vmatprep.mubr.bf16.mxu0 0
        %582 = vmatmul.mubr.bf16.gmra.mrb[0].mxu0 %v346
        %v583 = vpop.f32.mrb[0].mxu0
        %v584 = vadd.f32 %v392, %v583
        %v585 = vpop.f32.mrb[0].mxu0
        %v586 = vadd.f32 %v396, %v585
        %v587 = vpop.f32.mrb[0].mxu0
        %v588 = vadd.f32 %v392, %v587
        %v589 = vpop.f32.mrb[0].mxu0
        %v590 = vadd.f32 %v396, %v589
        %591 = vmatprep.mubr.bf16.mxu0 0
        %592 = vmatmul.mubr.bf16.gmra.mrb[0].mxu0 %v347
        %v593 = vpop.f32.mrb[0].mxu0
        %v594 = vadd.f32 %v392, %v593
        %v595 = vpop.f32.mrb[0].mxu0
        %v596 = vadd.f32 %v396, %v595
        %v597 = vpop.f32.mrb[0].mxu0
        %v598 = vadd.f32 %v392, %v597
        %v599 = vpop.f32.mrb[0].mxu0
        %v600 = vadd.f32 %v396, %v599
        %601 = vmatprep.mubr.bf16.mxu0 0
        %602 = vmatmul.mubr.bf16.gmra.mrb[0].mxu0 %v348
        %v603 = vpop.f32.mrb[0].mxu0
        %v604 = vadd.f32 %v392, %v603
        %v605 = vpop.f32.mrb[0].mxu0
        %v606 = vadd.f32 %v396, %v605
        %v607 = vpop.f32.mrb[0].mxu0
        %v608 = vadd.f32 %v392, %v607
        %v609 = vpop.f32.mrb[0].mxu0
        %v610 = vadd.f32 %v396, %v609
        %611 = vmatprep.mubr.bf16.mxu0 0
        %612 = vmatmul.mubr.bf16.gmra.mrb[0].mxu0 %v349
        %v613 = vpop.f32.mrb[0].mxu0
        %v614 = vadd.f32 %v392, %v613
        %v615 = vpop.f32.mrb[0].mxu0
        %v616 = vadd.f32 %v396, %v615
        %v617 = vpop.f32.mrb[0].mxu0
        %v618 = vadd.f32 %v392, %v617
        %v619 = vpop.f32.mrb[0].mxu0
        %v620 = vadd.f32 %v396, %v619
        %621 = vmatprep.mubr.bf16.mxu0 0
        %622 = vmatmul.mubr.bf16.gmra.mrb[0].mxu0 %v350
        %v623 = vpop.f32.mrb[0].mxu0
        %v624 = vadd.f32 %v392, %v623
        %v625 = vpop.f32.mrb[0].mxu0
        %v626 = vadd.f32 %v396, %v625
        %v627 = vpop.f32.mrb[0].mxu0
        %v628 = vadd.f32 %v392, %v627
        %v629 = vpop.f32.mrb[0].mxu0
        %v630 = vadd.f32 %v396, %v629
        %631 = vmatprep.mubr.bf16.mxu0 0
        %632 = vmatmul.mubr.bf16.gmra.mrb[0].mxu0 %v351
        %v633 = vpop.f32.mrb[0].mxu0
        %v634 = vadd.f32 %v392, %v633
        %v635 = vpop.f32.mrb[0].mxu0
        %v636 = vadd.f32 %v396, %v635
        %v637 = vpop.f32.mrb[0].mxu0
        %v638 = vadd.f32 %v392, %v637
        %v639 = vpop.f32.mrb[0].mxu0
        %v640 = vadd.f32 %v396, %v639
        %641 = vmatprep.mubr.bf16.mxu0 0
        %642 = vmatmul.mubr.bf16.gmra.mrb[0].mxu0 %v352
        %v643 = vpop.f32.mrb[0].mxu0
        %v644 = vadd.f32 %v392, %v643
        %v645 = vpop.f32.mrb[0].mxu0
        %v646 = vadd.f32 %v396, %v645
        %v647 = vpop.f32.mrb[0].mxu0
        %v648 = vadd.f32 %v392, %v647
        %v649 = vpop.f32.mrb[0].mxu0
        %v650 = vadd.f32 %v396, %v649
        %651 = vmatprep.mubr.bf16.mxu0 0
        %652 = vmatmul.mubr.bf16.gmra.mrb[0].mxu0 %v353
        %v653 = vpop.f32.mrb[0].mxu0
        %v654 = vadd.f32 %v392, %v653
        %v655 = vpop.f32.mrb[0].mxu0
        %v656 = vadd.f32 %v396, %v655
        %v657 = vpop.f32.mrb[0].mxu0
        %v658 = vadd.f32 %v392, %v657
        %v659 = vpop.f32.mrb[0].mxu0
        %v660 = vadd.f32 %v396, %v659
        %661 = vmatprep.mubr.bf16.mxu0 0
        %662 = vmatmul.mubr.bf16.gmra.mrb[0].mxu0 %v354
        %v663 = vpop.f32.mrb[0].mxu0
        %v664 = vadd.f32 %v392, %v663
        %v665 = vpop.f32.mrb[0].mxu0
        %v666 = vadd.f32 %v396, %v665
        %v667 = vpop.f32.mrb[0].mxu0
        %v668 = vadd.f32 %v392, %v667
        %v669 = vpop.f32.mrb[0].mxu0
        %v670 = vadd.f32 %v396, %v669
        %671 = vmatprep.mubr.bf16.mxu0 0
        %672 = vmatmul.mubr.bf16.gmra.mrb[0].mxu0 %v355
        %v673 = vpop.f32.mrb[0].mxu0
        %v674 = vadd.f32 %v392, %v673
        %v675 = vpop.f32.mrb[0].mxu0
        %v676 = vadd.f32 %v396, %v675
        %v677 = vpop.f32.mrb[0].mxu0
        %v678 = vadd.f32 %v392, %v677
        %v679 = vpop.f32.mrb[0].mxu0
        %v680 = vadd.f32 %v396, %v679
        %681 = vmatprep.mubr.bf16.mxu0 0
        %682 = vmatmul.mubr.bf16.gmra.mrb[0].mxu0 %v356
        %v683 = vpop.f32.mrb[0].mxu0
        %v684 = vadd.f32 %v392, %v683
        %v685 = vpop.f32.mrb[0].mxu0
        %v686 = vadd.f32 %v396, %v685
        %v687 = vpop.f32.mrb[0].mxu0
        %v688 = vadd.f32 %v392, %v687
        %v689 = vpop.f32.mrb[0].mxu0
        %v690 = vadd.f32 %v396, %v689
        %691 = vmatprep.mubr.bf16.mxu0 0
        %692 = vmatmul.mubr.bf16.gmra.mrb[0].mxu0 %v357
        %v693 = vpop.f32.mrb[0].mxu0
        %v694 = vadd.f32 %v392, %v693
        %v695 = vpop.f32.mrb[0].mxu0
        %v696 = vadd.f32 %v396, %v695
        %v697 = vpop.f32.mrb[0].mxu0
        %v698 = vadd.f32 %v392, %v697
        %v699 = vpop.f32.mrb[0].mxu0
        %v700 = vadd.f32 %v396, %v699
        %701 = vmatprep.mubr.bf16.mxu0 0
        %702 = vmatmul.mubr.bf16.gmra.mrb[0].mxu0 %v358
        %v703 = vpop.f32.mrb[0].mxu0
        %v704 = vadd.f32 %v392, %v703
        %v705 = vpop.f32.mrb[0].mxu0
        %v706 = vadd.f32 %v396, %v705
        %v707 = vpop.f32.mrb[0].mxu0
        %v708 = vadd.f32 %v392, %v707
        %v709 = vpop.f32.mrb[0].mxu0
        %v710 = vadd.f32 %v396, %v709
        %711 = vmatprep.mubr.bf16.mxu0 0
        %712 = vmatmul.mubr.bf16.gmra.mrb[0].mxu0 %v359
        %v713 = vpop.f32.mrb[0].mxu0
        %v714 = vadd.f32 %v392, %v713
        %v715 = vpop.f32.mrb[0].mxu0
        %v716 = vadd.f32 %v396, %v715
        %v717 = vpop.f32.mrb[0].mxu0
        %v718 = vadd.f32 %v392, %v717
        %v719 = vpop.f32.mrb[0].mxu0
        %v720 = vadd.f32 %v396, %v719
        %721 = vmatprep.mubr.bf16.mxu0 0
        %722 = vmatmul.mubr.bf16.gmra.mrb[0].mxu0 %v360
        %v723 = vpop.f32.mrb[0].mxu0
        %v724 = vadd.f32 %v392, %v723
        %v725 = vpop.f32.mrb[0].mxu0
        %v726 = vadd.f32 %v396, %v725
        %v727 = vpop.f32.mrb[0].mxu0
        %v728 = vadd.f32 %v392, %v727
        %v729 = vpop.f32.mrb[0].mxu0
        %v730 = vadd.f32 %v396, %v729
        %731 = vmatprep.mubr.bf16.mxu0 0
        %732 = vmatmul.mubr.bf16.gmra.mrb[0].mxu0 %v361
        %v733 = vpop.f32.mrb[0].mxu0
        %v734 = vadd.f32 %v392, %v733
        %v735 = vpop.f32.mrb[0].mxu0
        %v736 = vadd.f32 %v396, %v735
        %v737 = vpop.f32.mrb[0].mxu0
        %v738 = vadd.f32 %v392, %v737
        %v739 = vpop.f32.mrb[0].mxu0
        %v740 = vadd.f32 %v396, %v739
        %741 = vmatprep.mubr.bf16.mxu0 0
        %742 = vmatmul.mubr.bf16.gmra.mrb[0].mxu0 %v362
        %v743 = vpop.f32.mrb[0].mxu0
        %v744 = vadd.f32 %v392, %v743
        %v745 = vpop.f32.mrb[0].mxu0
        %v746 = vadd.f32 %v396, %v745
        %v747 = vpop.f32.mrb[0].mxu0
        %v748 = vadd.f32 %v392, %v747
        %v749 = vpop.f32.mrb[0].mxu0
        %v750 = vadd.f32 %v396, %v749
        %751 = vmatprep.mubr.bf16.mxu0 0
        %752 = vmatmul.mubr.bf16.gmra.mrb[0].mxu0 %v363
        %v753 = vpop.f32.mrb[0].mxu0
        %v754 = vadd.f32 %v392, %v753
        %v755 = vpop.f32.mrb[0].mxu0
        %v756 = vadd.f32 %v396, %v755
        %v757 = vpop.f32.mrb[0].mxu0
        %v758 = vadd.f32 %v392, %v757
        %v759 = vpop.f32.mrb[0].mxu0
        %v760 = vadd.f32 %v396, %v759
        %761 = vmatprep.mubr.bf16.mxu0 0
        %762 = vmatmul.mubr.bf16.gmra.mrb[0].mxu0 %v364
        %v763 = vpop.f32.mrb[0].mxu0
        %v764 = vadd.f32 %v392, %v763
        %v765 = vpop.f32.mrb[0].mxu0
        %v766 = vadd.f32 %v396, %v765
        %v767 = vpop.f32.mrb[0].mxu0
        %v768 = vadd.f32 %v392, %v767
        %v769 = vpop.f32.mrb[0].mxu0
        %v770 = vadd.f32 %v396, %v769
        %771 = vmatprep.mubr.bf16.mxu0 0
        %772 = vmatmul.mubr.bf16.gmra.mrb[0].mxu0 %v365
        %v773 = vpop.f32.mrb[0].mxu0
        %v774 = vadd.f32 %v392, %v773
        %v775 = vpop.f32.mrb[0].mxu0
        %v776 = vadd.f32 %v396, %v775
        %v777 = vpop.f32.mrb[0].mxu0
        %v778 = vadd.f32 %v392, %v777
        %v779 = vpop.f32.mrb[0].mxu0
        %v780 = vadd.f32 %v396, %v779
        %781 = vmatprep.mubr.bf16.mxu0 0
        %782 = vmatmul.mubr.bf16.gmra.mrb[0].mxu0 %v366
        %v783 = vpop.f32.mrb[0].mxu0
        %v784 = vadd.f32 %v392, %v783
        %v785 = vpop.f32.mrb[0].mxu0
        %v786 = vadd.f32 %v396, %v785
        %v787 = vpop.f32.mrb[0].mxu0
        %v788 = vadd.f32 %v392, %v787
        %v789 = vpop.f32.mrb[0].mxu0
        %v790 = vadd.f32 %v396, %v789
        %791 = vmatprep.mubr.bf16.mxu0 0
        %792 = vmatmul.mubr.bf16.gmra.mrb[0].mxu0 %v367
        %v793 = vpop.f32.mrb[0].mxu0
        %v794 = vadd.f32 %v392, %v793
        %v795 = vpop.f32.mrb[0].mxu0
        %v796 = vadd.f32 %v396, %v795
        %v797 = vpop.f32.mrb[0].mxu0
        %v798 = vadd.f32 %v392, %v797
        %v799 = vpop.f32.mrb[0].mxu0
        %v800 = vadd.f32 %v396, %v799
        %801 = vmatprep.mubr.bf16.mxu0 0
        %802 = vmatmul.mubr.bf16.gmra.mrb[0].mxu0 %v368
        %v803 = vpop.f32.mrb[0].mxu0
        %v804 = vadd.f32 %v392, %v803
        %v805 = vpop.f32.mrb[0].mxu0
        %v806 = vadd.f32 %v396, %v805
        %v807 = vpop.f32.mrb[0].mxu0
        %v808 = vadd.f32 %v392, %v807
        %v809 = vpop.f32.mrb[0].mxu0
        %v810 = vadd.f32 %v396, %v809
        %811 = vmatprep.mubr.bf16.mxu0 0
        %812 = vmatmul.mubr.bf16.gmra.mrb[0].mxu0 %v369
        %v813 = vpop.f32.mrb[0].mxu0
        %v814 = vadd.f32 %v392, %v813
        %v815 = vpop.f32.mrb[0].mxu0
        %v816 = vadd.f32 %v396, %v815
        %v817 = vpop.f32.mrb[0].mxu0
        %v818 = vadd.f32 %v392, %v817
        %v819 = vpop.f32.mrb[0].mxu0
        %v820 = vadd.f32 %v396, %v819
        %821 = vmatprep.mubr.bf16.mxu0 0
        %822 = vmatmul.mubr.bf16.gmra.mrb[0].mxu0 %v370
        %v823 = vpop.f32.mrb[0].mxu0
        %v824 = vadd.f32 %v392, %v823
        %v825 = vpop.f32.mrb[0].mxu0
        %v826 = vadd.f32 %v396, %v825
        %v827 = vpop.f32.mrb[0].mxu0
        %v828 = vadd.f32 %v392, %v827
        %v829 = vpop.f32.mrb[0].mxu0
        %v830 = vadd.f32 %v396, %v829
        %831 = vdwg.mxu0
        %v832 = vmul.f32 %v514, 0.5
        %v833 = vmul.f32 %v516, 0.5
        %v834 = vmul.f32 %v518, 0.5
        %v835 = vmul.f32 %v520, 0.5
        %v836 = vmul.f32 %v524, 0.5
        %v837 = vmul.f32 %v526, 0.5
        %v838 = vmul.f32 %v528, 0.5
        %v839 = vmul.f32 %v530, 0.5
        %v840 = vmul.f32 %v534, 0.5
        %v841 = vmul.f32 %v536, 0.5
        %v842 = vmul.f32 %v538, 0.5
        %v843 = vmul.f32 %v540, 0.5
        %v844 = vmul.f32 %v544, 0.5
        %v845 = vmul.f32 %v546, 0.5
        %v846 = vmul.f32 %v548, 0.5
        %v847 = vmul.f32 %v550, 0.5
        %v848 = vmul.f32 %v554, 0.5
        %v849 = vmul.f32 %v556, 0.5
        %v850 = vmul.f32 %v558, 0.5
        %v851 = vmul.f32 %v560, 0.5
        %v852 = vmul.f32 %v564, 0.5
        %v853 = vmul.f32 %v566, 0.5
        %v854 = vmul.f32 %v568, 0.5
        %v855 = vmul.f32 %v570, 0.5
        %v856 = vmul.f32 %v574, 0.5
        %v857 = vmul.f32 %v576, 0.5
        %v858 = vmul.f32 %v578, 0.5
        %v859 = vmul.f32 %v580, 0.5
        %v860 = vmul.f32 %v584, 0.5
        %v861 = vmul.f32 %v586, 0.5
        %v862 = vmul.f32 %v588, 0.5
        %v863 = vmul.f32 %v590, 0.5
        %v864 = vmul.f32 %v594, 0.5
        %v865 = vmul.f32 %v596, 0.5
        %v866 = vmul.f32 %v598, 0.5
        %v867 = vmul.f32 %v600, 0.5
        %v868 = vmul.f32 %v604, 0.5
        %v869 = vmul.f32 %v606, 0.5
        %v870 = vmul.f32 %v608, 0.5
        %v871 = vmul.f32 %v610, 0.5
        %v872 = vmul.f32 %v614, 0.5
        %v873 = vmul.f32 %v616, 0.5
        %v874 = vmul.f32 %v618, 0.5
        %v875 = vmul.f32 %v620, 0.5
        %v876 = vmul.f32 %v624, 0.5
        %v877 = vmul.f32 %v626, 0.5
        %v878 = vmul.f32 %v628, 0.5
        %v879 = vmul.f32 %v630, 0.5
        %v880 = vmul.f32 %v634, 0.5
        %v881 = vmul.f32 %v636, 0.5
        %v882 = vmul.f32 %v638, 0.5
        %v883 = vmul.f32 %v640, 0.5
        %v884 = vmul.f32 %v644, 0.5
        %v885 = vmul.f32 %v646, 0.5
        %v886 = vmul.f32 %v648, 0.5
        %v887 = vmul.f32 %v650, 0.5
        %v888 = vmul.f32 %v654, 0.5
        %v889 = vmul.f32 %v656, 0.5
        %v890 = vmul.f32 %v658, 0.5
        %v891 = vmul.f32 %v660, 0.5
        %v892 = vmul.f32 %v664, 0.5
        %v893 = vmul.f32 %v666, 0.5
        %v894 = vmul.f32 %v668, 0.5
        %v895 = vmul.f32 %v670, 0.5
        %v896 = vmul.f32 %v674, 0.5
        %v897 = vmul.f32 %v676, 0.5
        %v898 = vmul.f32 %v678, 0.5
        %v899 = vmul.f32 %v680, 0.5
        %v900 = vmul.f32 %v684, 0.5
        %v901 = vmul.f32 %v686, 0.5
        %v902 = vmul.f32 %v688, 0.5
        %v903 = vmul.f32 %v690, 0.5
        %v904 = vmul.f32 %v694, 0.5
        %v905 = vmul.f32 %v696, 0.5
        %v906 = vmul.f32 %v698, 0.5
        %v907 = vmul.f32 %v700, 0.5
        %v908 = vmul.f32 %v704, 0.5
        %v909 = vmul.f32 %v706, 0.5
        %v910 = vmul.f32 %v708, 0.5
        %v911 = vmul.f32 %v710, 0.5
        %v912 = vmul.f32 %v714, 0.5
        %v913 = vmul.f32 %v716, 0.5
        %v914 = vmul.f32 %v718, 0.5
        %v915 = vmul.f32 %v720, 0.5
        %v916 = vmul.f32 %v724, 0.5
        %v917 = vmul.f32 %v726, 0.5
        %v918 = vmul.f32 %v728, 0.5
        %v919 = vmul.f32 %v730, 0.5
        %v920 = vmul.f32 %v734, 0.5
        %v921 = vmul.f32 %v736, 0.5
        %v922 = vmul.f32 %v738, 0.5
        %v923 = vmul.f32 %v740, 0.5
        %v924 = vmul.f32 %v744, 0.5
        %v925 = vmul.f32 %v746, 0.5
        %v926 = vmul.f32 %v748, 0.5
        %v927 = vmul.f32 %v750, 0.5
        %v928 = vmul.f32 %v754, 0.5
        %v929 = vmul.f32 %v756, 0.5
        %v930 = vmul.f32 %v758, 0.5
        %v931 = vmul.f32 %v760, 0.5
        %v932 = vmul.f32 %v764, 0.5
        %v933 = vmul.f32 %v766, 0.5
        %v934 = vmul.f32 %v768, 0.5
        %v935 = vmul.f32 %v770, 0.5
        %v936 = vmul.f32 %v774, 0.5
        %v937 = vmul.f32 %v776, 0.5
        %v938 = vmul.f32 %v778, 0.5
        %v939 = vmul.f32 %v780, 0.5
        %v940 = vmul.f32 %v784, 0.5
        %v941 = vmul.f32 %v786, 0.5
        %v942 = vmul.f32 %v788, 0.5
        %v943 = vmul.f32 %v790, 0.5
        %v944 = vmul.f32 %v794, 0.5
        %v945 = vmul.f32 %v796, 0.5
        %v946 = vmul.f32 %v798, 0.5
        %v947 = vmul.f32 %v800, 0.5
        %v948 = vmul.f32 %v804, 0.5
        %v949 = vmul.f32 %v806, 0.5
        %v950 = vmul.f32 %v808, 0.5
        %v951 = vmul.f32 %v810, 0.5
        %v952 = vmul.f32 %v814, 0.5
        %v953 = vmul.f32 %v816, 0.5
        %v954 = vmul.f32 %v818, 0.5
        %v955 = vmul.f32 %v820, 0.5
        %v956 = vmul.f32 %v824, 0.5
        %v957 = vmul.f32 %v826, 0.5
        %v958 = vmul.f32 %v828, 0.5
        %v959 = vmul.f32 %v830, 0.5
        %v960 = vmul.f32 %v514, 0.70710677
        %v961 = vmul.f32 %v516, 0.70710677
        %v962 = vmul.f32 %v518, 0.70710677
        %v963 = vmul.f32 %v520, 0.70710677
        %v964 = vmul.f32 %v524, 0.70710677
        %v965 = vmul.f32 %v526, 0.70710677
        %v966 = vmul.f32 %v528, 0.70710677
        %v967 = vmul.f32 %v530, 0.70710677
        %v968 = vmul.f32 %v534, 0.70710677
        %v969 = vmul.f32 %v536, 0.70710677
        %v970 = vmul.f32 %v538, 0.70710677
        %v971 = vmul.f32 %v540, 0.70710677
        %v972 = vmul.f32 %v544, 0.70710677
        %v973 = vmul.f32 %v546, 0.70710677
        %v974 = vmul.f32 %v548, 0.70710677
        %v975 = vmul.f32 %v550, 0.70710677
        %v976 = vmul.f32 %v554, 0.70710677
        %v977 = vmul.f32 %v556, 0.70710677
        %v978 = vmul.f32 %v558, 0.70710677
        %v979 = vmul.f32 %v560, 0.70710677
        %v980 = vmul.f32 %v564, 0.70710677
        %v981 = vmul.f32 %v566, 0.70710677
        %v982 = vmul.f32 %v568, 0.70710677
        %v983 = vmul.f32 %v570, 0.70710677
        %v984 = vmul.f32 %v574, 0.70710677
        %v985 = vmul.f32 %v576, 0.70710677
        %v986 = vmul.f32 %v578, 0.70710677
        %v987 = vmul.f32 %v580, 0.70710677
        %v988 = vmul.f32 %v584, 0.70710677
        %v989 = vmul.f32 %v586, 0.70710677
        %v990 = vmul.f32 %v588, 0.70710677
        %v991 = vmul.f32 %v590, 0.70710677
        %v992 = vmul.f32 %v594, 0.70710677
        %v993 = vmul.f32 %v596, 0.70710677
        %v994 = vmul.f32 %v598, 0.70710677
        %v995 = vmul.f32 %v600, 0.70710677
        %v996 = vmul.f32 %v604, 0.70710677
        %v997 = vmul.f32 %v606, 0.70710677
        %v998 = vmul.f32 %v608, 0.70710677
        %v999 = vmul.f32 %v610, 0.70710677
        %v1000 = vmul.f32 %v614, 0.70710677
        %v1001 = vmul.f32 %v616, 0.70710677
        %v1002 = vmul.f32 %v618, 0.70710677
        %v1003 = vmul.f32 %v620, 0.70710677
        %v1004 = vmul.f32 %v624, 0.70710677
        %v1005 = vmul.f32 %v626, 0.70710677
        %v1006 = vmul.f32 %v628, 0.70710677
        %v1007 = vmul.f32 %v630, 0.70710677
        %v1008 = vmul.f32 %v634, 0.70710677
        %v1009 = vmul.f32 %v636, 0.70710677
        %v1010 = vmul.f32 %v638, 0.70710677
        %v1011 = vmul.f32 %v640, 0.70710677
        %v1012 = vmul.f32 %v644, 0.70710677
        %v1013 = vmul.f32 %v646, 0.70710677
        %v1014 = vmul.f32 %v648, 0.70710677
        %v1015 = vmul.f32 %v650, 0.70710677
        %v1016 = vmul.f32 %v654, 0.70710677
        %v1017 = vmul.f32 %v656, 0.70710677
        %v1018 = vmul.f32 %v658, 0.70710677
        %v1019 = vmul.f32 %v660, 0.70710677
        %v1020 = vmul.f32 %v664, 0.70710677
        %v1021 = vmul.f32 %v666, 0.70710677
        %v1022 = vmul.f32 %v668, 0.70710677
        %v1023 = vmul.f32 %v670, 0.70710677
        %v1024 = vmul.f32 %v674, 0.70710677
        %v1025 = vmul.f32 %v676, 0.70710677
        %v1026 = vmul.f32 %v678, 0.70710677
        %v1027 = vmul.f32 %v680, 0.70710677
        %v1028 = vmul.f32 %v684, 0.70710677
        %v1029 = vmul.f32 %v686, 0.70710677
        %v1030 = vmul.f32 %v688, 0.70710677
        %v1031 = vmul.f32 %v690, 0.70710677
        %v1032 = vmul.f32 %v694, 0.70710677
        %v1033 = vmul.f32 %v696, 0.70710677
        %v1034 = vmul.f32 %v698, 0.70710677
        %v1035 = vmul.f32 %v700, 0.70710677
        %v1036 = vmul.f32 %v704, 0.70710677
        %v1037 = vmul.f32 %v706, 0.70710677
        %v1038 = vmul.f32 %v708, 0.70710677
        %v1039 = vmul.f32 %v710, 0.70710677
        %v1040 = vmul.f32 %v714, 0.70710677
        %v1041 = vmul.f32 %v716, 0.70710677
        %v1042 = vmul.f32 %v718, 0.70710677
        %v1043 = vmul.f32 %v720, 0.70710677
        %v1044 = vmul.f32 %v724, 0.70710677
        %v1045 = vmul.f32 %v726, 0.70710677
        %v1046 = vmul.f32 %v728, 0.70710677
        %v1047 = vmul.f32 %v730, 0.70710677
        %v1048 = vmul.f32 %v734, 0.70710677
        %v1049 = vmul.f32 %v736, 0.70710677
        %v1050 = vmul.f32 %v738, 0.70710677
        %v1051 = vmul.f32 %v740, 0.70710677
        %v1052 = vmul.f32 %v744, 0.70710677
        %v1053 = vmul.f32 %v746, 0.70710677
        %v1054 = vmul.f32 %v748, 0.70710677
        %v1055 = vmul.f32 %v750, 0.70710677
        %v1056 = vmul.f32 %v754, 0.70710677
        %v1057 = vmul.f32 %v756, 0.70710677
        %v1058 = vmul.f32 %v758, 0.70710677
        %v1059 = vmul.f32 %v760, 0.70710677
        %v1060 = vmul.f32 %v764, 0.70710677
        %v1061 = vmul.f32 %v766, 0.70710677
        %v1062 = vmul.f32 %v768, 0.70710677
        %v1063 = vmul.f32 %v770, 0.70710677
        %v1064 = vmul.f32 %v774, 0.70710677
        %v1065 = vmul.f32 %v776, 0.70710677
        %v1066 = vmul.f32 %v778, 0.70710677
        %v1067 = vmul.f32 %v780, 0.70710677
        %v1068 = vmul.f32 %v784, 0.70710677
        %v1069 = vmul.f32 %v786, 0.70710677
        %v1070 = vmul.f32 %v788, 0.70710677
        %v1071 = vmul.f32 %v790, 0.70710677
        %v1072 = vmul.f32 %v794, 0.70710677
        %v1073 = vmul.f32 %v796, 0.70710677
        %v1074 = vmul.f32 %v798, 0.70710677
        %v1075 = vmul.f32 %v800, 0.70710677
        %v1076 = vmul.f32 %v804, 0.70710677
        %v1077 = vmul.f32 %v806, 0.70710677
        %v1078 = vmul.f32 %v808, 0.70710677
        %v1079 = vmul.f32 %v810, 0.70710677
        %v1080 = vmul.f32 %v814, 0.70710677
        %v1081 = vmul.f32 %v816, 0.70710677
        %v1082 = vmul.f32 %v818, 0.70710677
        %v1083 = vmul.f32 %v820, 0.70710677
        %v1084 = vmul.f32 %v824, 0.70710677
        %v1085 = vmul.f32 %v826, 0.70710677
        %v1086 = vmul.f32 %v828, 0.70710677
        %v1087 = vmul.f32 %v830, 0.70710677
        %v1088 = verf.f32.pop %v960
        %v1089 = verf.f32.pop %v961
        %v1090 = verf.f32.pop %v962
        %v1091 = verf.f32.pop %v963
        %v1092 = verf.f32.pop %v964
        %v1093 = verf.f32.pop %v965
        %v1094 = verf.f32.pop %v966
        %v1095 = verf.f32.pop %v967
        %v1096 = verf.f32.pop %v968
        %v1097 = verf.f32.pop %v969
        %v1098 = verf.f32.pop %v970
        %v1099 = verf.f32.pop %v971
        %v1100 = verf.f32.pop %v972
        %v1101 = verf.f32.pop %v973
        %v1102 = verf.f32.pop %v974
        %v1103 = verf.f32.pop %v975
        %v1104 = verf.f32.pop %v976
        %v1105 = verf.f32.pop %v977
        %v1106 = verf.f32.pop %v978
        %v1107 = verf.f32.pop %v979
        %v1108 = verf.f32.pop %v980
        %v1109 = verf.f32.pop %v981
        %v1110 = verf.f32.pop %v982
        %v1111 = verf.f32.pop %v983
        %v1112 = verf.f32.pop %v984
        %v1113 = verf.f32.pop %v985
        %v1114 = verf.f32.pop %v986
        %v1115 = verf.f32.pop %v987
        %v1116 = verf.f32.pop %v988
        %v1117 = verf.f32.pop %v989
        %v1118 = verf.f32.pop %v990
        %v1119 = verf.f32.pop %v991
        %v1120 = verf.f32.pop %v992
        %v1121 = verf.f32.pop %v993
        %v1122 = verf.f32.pop %v994
        %v1123 = verf.f32.pop %v995
        %v1124 = verf.f32.pop %v996
        %v1125 = verf.f32.pop %v997
        %v1126 = verf.f32.pop %v998
        %v1127 = verf.f32.pop %v999
        %v1128 = verf.f32.pop %v1000
        %v1129 = verf.f32.pop %v1001
        %v1130 = verf.f32.pop %v1002
        %v1131 = verf.f32.pop %v1003
        %v1132 = verf.f32.pop %v1004
        %v1133 = verf.f32.pop %v1005
        %v1134 = verf.f32.pop %v1006
        %v1135 = verf.f32.pop %v1007
        %v1136 = verf.f32.pop %v1008
        %v1137 = verf.f32.pop %v1009
        %v1138 = verf.f32.pop %v1010
        %v1139 = verf.f32.pop %v1011
        %v1140 = verf.f32.pop %v1012
        %v1141 = verf.f32.pop %v1013
        %v1142 = verf.f32.pop %v1014
        %v1143 = verf.f32.pop %v1015
        %v1144 = verf.f32.pop %v1016
        %v1145 = verf.f32.pop %v1017
        %v1146 = verf.f32.pop %v1018
        %v1147 = verf.f32.pop %v1019
        %v1148 = verf.f32.pop %v1020
        %v1149 = verf.f32.pop %v1021
        %v1150 = verf.f32.pop %v1022
        %v1151 = verf.f32.pop %v1023
        %v1152 = verf.f32.pop %v1024
        %v1153 = verf.f32.pop %v1025
        %v1154 = verf.f32.pop %v1026
        %v1155 = verf.f32.pop %v1027
        %v1156 = verf.f32.pop %v1028
        %v1157 = verf.f32.pop %v1029
        %v1158 = verf.f32.pop %v1030
        %v1159 = verf.f32.pop %v1031
        %v1160 = verf.f32.pop %v1032
        %v1161 = verf.f32.pop %v1033
        %v1162 = verf.f32.pop %v1034
        %v1163 = verf.f32.pop %v1035
        %v1164 = verf.f32.pop %v1036
        %v1165 = verf.f32.pop %v1037
        %v1166 = verf.f32.pop %v1038
        %v1167 = verf.f32.pop %v1039
        %v1168 = verf.f32.pop %v1040
        %v1169 = verf.f32.pop %v1041
        %v1170 = verf.f32.pop %v1042
        %v1171 = verf.f32.pop %v1043
        %v1172 = verf.f32.pop %v1044
        %v1173 = verf.f32.pop %v1045
        %v1174 = verf.f32.pop %v1046
        %v1175 = verf.f32.pop %v1047
        %v1176 = verf.f32.pop %v1048
        %v1177 = verf.f32.pop %v1049
        %v1178 = verf.f32.pop %v1050
        %v1179 = verf.f32.pop %v1051
        %v1180 = verf.f32.pop %v1052
        %v1181 = verf.f32.pop %v1053
        %v1182 = verf.f32.pop %v1054
        %v1183 = verf.f32.pop %v1055
        %v1184 = verf.f32.pop %v1056
        %v1185 = verf.f32.pop %v1057
        %v1186 = verf.f32.pop %v1058
        %v1187 = verf.f32.pop %v1059
        %v1188 = verf.f32.pop %v1060
        %v1189 = verf.f32.pop %v1061
        %v1190 = verf.f32.pop %v1062
        %v1191 = verf.f32.pop %v1063
        %v1192 = verf.f32.pop %v1064
        %v1193 = verf.f32.pop %v1065
        %v1194 = verf.f32.pop %v1066
        %v1195 = verf.f32.pop %v1067
        %v1196 = verf.f32.pop %v1068
        %v1197 = verf.f32.pop %v1069
        %v1198 = verf.f32.pop %v1070
        %v1199 = verf.f32.pop %v1071
        %v1200 = verf.f32.pop %v1072
        %v1201 = verf.f32.pop %v1073
        %v1202 = verf.f32.pop %v1074
        %v1203 = verf.f32.pop %v1075
        %v1204 = verf.f32.pop %v1076
        %v1205 = verf.f32.pop %v1077
        %v1206 = verf.f32.pop %v1078
        %v1207 = verf.f32.pop %v1079
        %v1208 = verf.f32.pop %v1080
        %v1209 = verf.f32.pop %v1081
        %v1210 = verf.f32.pop %v1082
        %v1211 = verf.f32.pop %v1083
        %v1212 = verf.f32.pop %v1084
        %v1213 = verf.f32.pop %v1085
        %v1214 = verf.f32.pop %v1086
        %v1215 = verf.f32.pop %v1087
        %v1216 = vadd.f32 %v1088, 1.0
        %v1217 = vadd.f32 %v1089, 1.0
        %v1218 = vadd.f32 %v1090, 1.0
        %v1219 = vadd.f32 %v1091, 1.0
        %v1220 = vadd.f32 %v1092, 1.0
        %v1221 = vadd.f32 %v1093, 1.0
        %v1222 = vadd.f32 %v1094, 1.0
        %v1223 = vadd.f32 %v1095, 1.0
        %v1224 = vadd.f32 %v1096, 1.0
        %v1225 = vadd.f32 %v1097, 1.0
        %v1226 = vadd.f32 %v1098, 1.0
        %v1227 = vadd.f32 %v1099, 1.0
        %v1228 = vadd.f32 %v1100, 1.0
        %v1229 = vadd.f32 %v1101, 1.0
        %v1230 = vadd.f32 %v1102, 1.0
        %v1231 = vadd.f32 %v1103, 1.0
        %v1232 = vadd.f32 %v1104, 1.0
        %v1233 = vadd.f32 %v1105, 1.0
        %v1234 = vadd.f32 %v1106, 1.0
        %v1235 = vadd.f32 %v1107, 1.0
        %v1236 = vadd.f32 %v1108, 1.0
        %v1237 = vadd.f32 %v1109, 1.0
        %v1238 = vadd.f32 %v1110, 1.0
        %v1239 = vadd.f32 %v1111, 1.0
        %v1240 = vadd.f32 %v1112, 1.0
        %v1241 = vadd.f32 %v1113, 1.0
        %v1242 = vadd.f32 %v1114, 1.0
        %v1243 = vadd.f32 %v1115, 1.0
        %v1244 = vadd.f32 %v1116, 1.0
        %v1245 = vadd.f32 %v1117, 1.0
        %v1246 = vadd.f32 %v1118, 1.0
        %v1247 = vadd.f32 %v1119, 1.0
        %v1248 = vadd.f32 %v1120, 1.0
        %v1249 = vadd.f32 %v1121, 1.0
        %v1250 = vadd.f32 %v1122, 1.0
        %v1251 = vadd.f32 %v1123, 1.0
        %v1252 = vadd.f32 %v1124, 1.0
        %v1253 = vadd.f32 %v1125, 1.0
        %v1254 = vadd.f32 %v1126, 1.0
        %v1255 = vadd.f32 %v1127, 1.0
        %v1256 = vadd.f32 %v1128, 1.0
        %v1257 = vadd.f32 %v1129, 1.0
        %v1258 = vadd.f32 %v1130, 1.0
        %v1259 = vadd.f32 %v1131, 1.0
        %v1260 = vadd.f32 %v1132, 1.0
        %v1261 = vadd.f32 %v1133, 1.0
        %v1262 = vadd.f32 %v1134, 1.0
        %v1263 = vadd.f32 %v1135, 1.0
        %v1264 = vadd.f32 %v1136, 1.0
        %v1265 = vadd.f32 %v1137, 1.0
        %v1266 = vadd.f32 %v1138, 1.0
        %v1267 = vadd.f32 %v1139, 1.0
        %v1268 = vadd.f32 %v1140, 1.0
        %v1269 = vadd.f32 %v1141, 1.0
        %v1270 = vadd.f32 %v1142, 1.0
        %v1271 = vadd.f32 %v1143, 1.0
        %v1272 = vadd.f32 %v1144, 1.0
        %v1273 = vadd.f32 %v1145, 1.0
        %v1274 = vadd.f32 %v1146, 1.0
        %v1275 = vadd.f32 %v1147, 1.0
        %v1276 = vadd.f32 %v1148, 1.0
        %v1277 = vadd.f32 %v1149, 1.0
        %v1278 = vadd.f32 %v1150, 1.0
        %v1279 = vadd.f32 %v1151, 1.0
        %v1280 = vadd.f32 %v1152, 1.0
        %v1281 = vadd.f32 %v1153, 1.0
        %v1282 = vadd.f32 %v1154, 1.0
        %v1283 = vadd.f32 %v1155, 1.0
        %v1284 = vadd.f32 %v1156, 1.0
        %v1285 = vadd.f32 %v1157, 1.0
        %v1286 = vadd.f32 %v1158, 1.0
        %v1287 = vadd.f32 %v1159, 1.0
        %v1288 = vadd.f32 %v1160, 1.0
        %v1289 = vadd.f32 %v1161, 1.0
        %v1290 = vadd.f32 %v1162, 1.0
        %v1291 = vadd.f32 %v1163, 1.0
        %v1292 = vadd.f32 %v1164, 1.0
        %v1293 = vadd.f32 %v1165, 1.0
        %v1294 = vadd.f32 %v1166, 1.0
        %v1295 = vadd.f32 %v1167, 1.0
        %v1296 = vadd.f32 %v1168, 1.0
        %v1297 = vadd.f32 %v1169, 1.0
        %v1298 = vadd.f32 %v1170, 1.0
        %v1299 = vadd.f32 %v1171, 1.0
        %v1300 = vadd.f32 %v1172, 1.0
        %v1301 = vadd.f32 %v1173, 1.0
        %v1302 = vadd.f32 %v1174, 1.0
        %v1303 = vadd.f32 %v1175, 1.0
        %v1304 = vadd.f32 %v1176, 1.0
        %v1305 = vadd.f32 %v1177, 1.0
        %v1306 = vadd.f32 %v1178, 1.0
        %v1307 = vadd.f32 %v1179, 1.0
        %v1308 = vadd.f32 %v1180, 1.0
        %v1309 = vadd.f32 %v1181, 1.0
        %v1310 = vadd.f32 %v1182, 1.0
        %v1311 = vadd.f32 %v1183, 1.0
        %v1312 = vadd.f32 %v1184, 1.0
        %v1313 = vadd.f32 %v1185, 1.0
        %v1314 = vadd.f32 %v1186, 1.0
        %v1315 = vadd.f32 %v1187, 1.0
        %v1316 = vadd.f32 %v1188, 1.0
        %v1317 = vadd.f32 %v1189, 1.0
        %v1318 = vadd.f32 %v1190, 1.0
        %v1319 = vadd.f32 %v1191, 1.0
        %v1320 = vadd.f32 %v1192, 1.0
        %v1321 = vadd.f32 %v1193, 1.0
        %v1322 = vadd.f32 %v1194, 1.0
        %v1323 = vadd.f32 %v1195, 1.0
        %v1324 = vadd.f32 %v1196, 1.0
        %v1325 = vadd.f32 %v1197, 1.0
        %v1326 = vadd.f32 %v1198, 1.0
        %v1327 = vadd.f32 %v1199, 1.0
        %v1328 = vadd.f32 %v1200, 1.0
        %v1329 = vadd.f32 %v1201, 1.0
        %v1330 = vadd.f32 %v1202, 1.0
        %v1331 = vadd.f32 %v1203, 1.0
        %v1332 = vadd.f32 %v1204, 1.0
        %v1333 = vadd.f32 %v1205, 1.0
        %v1334 = vadd.f32 %v1206, 1.0
        %v1335 = vadd.f32 %v1207, 1.0
        %v1336 = vadd.f32 %v1208, 1.0
        %v1337 = vadd.f32 %v1209, 1.0
        %v1338 = vadd.f32 %v1210, 1.0
        %v1339 = vadd.f32 %v1211, 1.0
        %v1340 = vadd.f32 %v1212, 1.0
        %v1341 = vadd.f32 %v1213, 1.0
        %v1342 = vadd.f32 %v1214, 1.0
        %v1343 = vadd.f32 %v1215, 1.0
        %v1344 = vmul.f32 %v832, %v1216
        %v1345 = vmul.f32 %v833, %v1217
        %v1346 = vmul.f32 %v834, %v1218
        %v1347 = vmul.f32 %v835, %v1219
        %v1348 = vmul.f32 %v836, %v1220
        %v1349 = vmul.f32 %v837, %v1221
        %v1350 = vmul.f32 %v838, %v1222
        %v1351 = vmul.f32 %v839, %v1223
        %v1352 = vmul.f32 %v840, %v1224
        %v1353 = vmul.f32 %v841, %v1225
        %v1354 = vmul.f32 %v842, %v1226
        %v1355 = vmul.f32 %v843, %v1227
        %v1356 = vmul.f32 %v844, %v1228
        %v1357 = vmul.f32 %v845, %v1229
        %v1358 = vmul.f32 %v846, %v1230
        %v1359 = vmul.f32 %v847, %v1231
        %v1360 = vmul.f32 %v848, %v1232
        %v1361 = vmul.f32 %v849, %v1233
        %v1362 = vmul.f32 %v850, %v1234
        %v1363 = vmul.f32 %v851, %v1235
        %v1364 = vmul.f32 %v852, %v1236
        %v1365 = vmul.f32 %v853, %v1237
        %v1366 = vmul.f32 %v854, %v1238
        %v1367 = vmul.f32 %v855, %v1239
        %v1368 = vmul.f32 %v856, %v1240
        %v1369 = vmul.f32 %v857, %v1241
        %v1370 = vmul.f32 %v858, %v1242
        %v1371 = vmul.f32 %v859, %v1243
        %v1372 = vmul.f32 %v860, %v1244
        %v1373 = vmul.f32 %v861, %v1245
        %v1374 = vmul.f32 %v862, %v1246
        %v1375 = vmul.f32 %v863, %v1247
        %v1376 = vmul.f32 %v864, %v1248
        %v1377 = vmul.f32 %v865, %v1249
        %v1378 = vmul.f32 %v866, %v1250
        %v1379 = vmul.f32 %v867, %v1251
        %v1380 = vmul.f32 %v868, %v1252
        %v1381 = vmul.f32 %v869, %v1253
        %v1382 = vmul.f32 %v870, %v1254
        %v1383 = vmul.f32 %v871, %v1255
        %v1384 = vmul.f32 %v872, %v1256
        %v1385 = vmul.f32 %v873, %v1257
        %v1386 = vmul.f32 %v874, %v1258
        %v1387 = vmul.f32 %v875, %v1259
        %v1388 = vmul.f32 %v876, %v1260
        %v1389 = vmul.f32 %v877, %v1261
        %v1390 = vmul.f32 %v878, %v1262
        %v1391 = vmul.f32 %v879, %v1263
        %v1392 = vmul.f32 %v880, %v1264
        %v1393 = vmul.f32 %v881, %v1265
        %v1394 = vmul.f32 %v882, %v1266
        %v1395 = vmul.f32 %v883, %v1267
        %v1396 = vmul.f32 %v884, %v1268
        %v1397 = vmul.f32 %v885, %v1269
        %v1398 = vmul.f32 %v886, %v1270
        %v1399 = vmul.f32 %v887, %v1271
        %v1400 = vmul.f32 %v888, %v1272
        %v1401 = vmul.f32 %v889, %v1273
        %v1402 = vmul.f32 %v890, %v1274
        %v1403 = vmul.f32 %v891, %v1275
        %v1404 = vmul.f32 %v892, %v1276
        %v1405 = vmul.f32 %v893, %v1277
        %v1406 = vmul.f32 %v894, %v1278
        %v1407 = vmul.f32 %v895, %v1279
        %v1408 = vmul.f32 %v896, %v1280
        %v1409 = vmul.f32 %v897, %v1281
        %v1410 = vmul.f32 %v898, %v1282
        %v1411 = vmul.f32 %v899, %v1283
        %v1412 = vmul.f32 %v900, %v1284
        %v1413 = vmul.f32 %v901, %v1285
        %v1414 = vmul.f32 %v902, %v1286
        %v1415 = vmul.f32 %v903, %v1287
        %v1416 = vmul.f32 %v904, %v1288
        %v1417 = vmul.f32 %v905, %v1289
        %v1418 = vmul.f32 %v906, %v1290
        %v1419 = vmul.f32 %v907, %v1291
        %v1420 = vmul.f32 %v908, %v1292
        %v1421 = vmul.f32 %v909, %v1293
        %v1422 = vmul.f32 %v910, %v1294
        %v1423 = vmul.f32 %v911, %v1295
        %v1424 = vmul.f32 %v912, %v1296
        %v1425 = vmul.f32 %v913, %v1297
        %v1426 = vmul.f32 %v914, %v1298
        %v1427 = vmul.f32 %v915, %v1299
        %v1428 = vmul.f32 %v916, %v1300
        %v1429 = vmul.f32 %v917, %v1301
        %v1430 = vmul.f32 %v918, %v1302
        %v1431 = vmul.f32 %v919, %v1303
        %v1432 = vmul.f32 %v920, %v1304
        %v1433 = vmul.f32 %v921, %v1305
        %v1434 = vmul.f32 %v922, %v1306
        %v1435 = vmul.f32 %v923, %v1307
        %v1436 = vmul.f32 %v924, %v1308
        %v1437 = vmul.f32 %v925, %v1309
        %v1438 = vmul.f32 %v926, %v1310
        %v1439 = vmul.f32 %v927, %v1311
        %v1440 = vmul.f32 %v928, %v1312
        %v1441 = vmul.f32 %v929, %v1313
        %v1442 = vmul.f32 %v930, %v1314
        %v1443 = vmul.f32 %v931, %v1315
        %v1444 = vmul.f32 %v932, %v1316
        %v1445 = vmul.f32 %v933, %v1317
        %v1446 = vmul.f32 %v934, %v1318
        %v1447 = vmul.f32 %v935, %v1319
        %v1448 = vmul.f32 %v936, %v1320
        %v1449 = vmul.f32 %v937, %v1321
        %v1450 = vmul.f32 %v938, %v1322
        %v1451 = vmul.f32 %v939, %v1323
        %v1452 = vmul.f32 %v940, %v1324
        %v1453 = vmul.f32 %v941, %v1325
        %v1454 = vmul.f32 %v942, %v1326
        %v1455 = vmul.f32 %v943, %v1327
        %v1456 = vmul.f32 %v944, %v1328
        %v1457 = vmul.f32 %v945, %v1329
        %v1458 = vmul.f32 %v946, %v1330
        %v1459 = vmul.f32 %v947, %v1331
        %v1460 = vmul.f32 %v948, %v1332
        %v1461 = vmul.f32 %v949, %v1333
        %v1462 = vmul.f32 %v950, %v1334
        %v1463 = vmul.f32 %v951, %v1335
        %v1464 = vmul.f32 %v952, %v1336
        %v1465 = vmul.f32 %v953, %v1337
        %v1466 = vmul.f32 %v954, %v1338
        %v1467 = vmul.f32 %v955, %v1339
        %v1468 = vmul.f32 %v956, %v1340
        %v1469 = vmul.f32 %v957, %v1341
        %v1470 = vmul.f32 %v958, %v1342
        %v1471 = vmul.f32 %v959, %v1343
        %v1472 = vpack.c.bf16 %v1346, %v1344
        %v1473 = vpack.c.bf16 %v1347, %v1345
        %v1474 = vpack.c.bf16 %v1350, %v1348
        %v1475 = vpack.c.bf16 %v1351, %v1349
        %v1476 = vpack.c.bf16 %v1354, %v1352
        %v1477 = vpack.c.bf16 %v1355, %v1353
        %v1478 = vpack.c.bf16 %v1358, %v1356
        %v1479 = vpack.c.bf16 %v1359, %v1357
        %v1480 = vpack.c.bf16 %v1362, %v1360
        %v1481 = vpack.c.bf16 %v1363, %v1361
        %v1482 = vpack.c.bf16 %v1366, %v1364
        %v1483 = vpack.c.bf16 %v1367, %v1365
        %v1484 = vpack.c.bf16 %v1370, %v1368
        %v1485 = vpack.c.bf16 %v1371, %v1369
        %v1486 = vpack.c.bf16 %v1374, %v1372
        %v1487 = vpack.c.bf16 %v1375, %v1373
        %v1488 = vpack.c.bf16 %v1378, %v1376
        %v1489 = vpack.c.bf16 %v1379, %v1377
        %v1490 = vpack.c.bf16 %v1382, %v1380
        %v1491 = vpack.c.bf16 %v1383, %v1381
        %v1492 = vpack.c.bf16 %v1386, %v1384
        %v1493 = vpack.c.bf16 %v1387, %v1385
        %v1494 = vpack.c.bf16 %v1390, %v1388
        %v1495 = vpack.c.bf16 %v1391, %v1389
        %v1496 = vpack.c.bf16 %v1394, %v1392
        %v1497 = vpack.c.bf16 %v1395, %v1393
        %v1498 = vpack.c.bf16 %v1398, %v1396
        %v1499 = vpack.c.bf16 %v1399, %v1397
        %v1500 = vpack.c.bf16 %v1402, %v1400
        %v1501 = vpack.c.bf16 %v1403, %v1401
        %v1502 = vpack.c.bf16 %v1406, %v1404
        %v1503 = vpack.c.bf16 %v1407, %v1405
        %v1504 = vpack.c.bf16 %v1410, %v1408
        %v1505 = vpack.c.bf16 %v1411, %v1409
        %v1506 = vpack.c.bf16 %v1414, %v1412
        %v1507 = vpack.c.bf16 %v1415, %v1413
        %v1508 = vpack.c.bf16 %v1418, %v1416
        %v1509 = vpack.c.bf16 %v1419, %v1417
        %v1510 = vpack.c.bf16 %v1422, %v1420
        %v1511 = vpack.c.bf16 %v1423, %v1421
        %v1512 = vpack.c.bf16 %v1426, %v1424
        %v1513 = vpack.c.bf16 %v1427, %v1425
        %v1514 = vpack.c.bf16 %v1430, %v1428
        %v1515 = vpack.c.bf16 %v1431, %v1429
        %v1516 = vpack.c.bf16 %v1434, %v1432
        %v1517 = vpack.c.bf16 %v1435, %v1433
        %v1518 = vpack.c.bf16 %v1438, %v1436
        %v1519 = vpack.c.bf16 %v1439, %v1437
        %v1520 = vpack.c.bf16 %v1442, %v1440
        %v1521 = vpack.c.bf16 %v1443, %v1441
        %v1522 = vpack.c.bf16 %v1446, %v1444
        %v1523 = vpack.c.bf16 %v1447, %v1445
        %v1524 = vpack.c.bf16 %v1450, %v1448
        %v1525 = vpack.c.bf16 %v1451, %v1449
        %v1526 = vpack.c.bf16 %v1454, %v1452
        %v1527 = vpack.c.bf16 %v1455, %v1453
        %v1528 = vpack.c.bf16 %v1458, %v1456
        %v1529 = vpack.c.bf16 %v1459, %v1457
        %v1530 = vpack.c.bf16 %v1462, %v1460
        %v1531 = vpack.c.bf16 %v1463, %v1461
        %v1532 = vpack.c.bf16 %v1466, %v1464
        %v1533 = vpack.c.bf16 %v1467, %v1465
        %v1534 = vpack.c.bf16 %v1470, %v1468
        %v1535 = vpack.c.bf16 %v1471, %v1469
        %v1536 = vld [vmem:[#allocation7] sm:$0xf]
        %v1537 = vld [vmem:[#allocation7 + $0x4] sm:$0xf]
        %v1538 = vld [vmem:[#allocation7 + $0x8] sm:$0xf]
        %v1539 = vld [vmem:[#allocation7 + $0xc] sm:$0xf]
        %v1540 = vld [vmem:[#allocation7 + $0x10] sm:$0xf]
        %v1541 = vld [vmem:[#allocation7 + $0x14] sm:$0xf]
        %v1542 = vld [vmem:[#allocation7 + $0x18] sm:$0xf]
        %v1543 = vld [vmem:[#allocation7 + $0x1c] sm:$0xf]
        %v1544 = vld [vmem:[#allocation7 + $0x20] sm:$0xf]
        %v1545 = vld [vmem:[#allocation7 + $0x24] sm:$0xf]
        %v1546 = vld [vmem:[#allocation7 + $0x28] sm:$0xf]
        %v1547 = vld [vmem:[#allocation7 + $0x2c] sm:$0xf]
        %v1548 = vld [vmem:[#allocation7 + $0x30] sm:$0xf]
        %v1549 = vld [vmem:[#allocation7 + $0x34] sm:$0xf]
        %v1550 = vld [vmem:[#allocation7 + $0x38] sm:$0xf]
        %v1551 = vld [vmem:[#allocation7 + $0x3c] sm:$0xf]
        %v1552 = vld [vmem:[#allocation7 + $0x40] sm:$0xf]
        %v1553 = vld [vmem:[#allocation7 + $0x44] sm:$0xf]
        %v1554 = vld [vmem:[#allocation7 + $0x48] sm:$0xf]
        %v1555 = vld [vmem:[#allocation7 + $0x4c] sm:$0xf]
        %v1556 = vld [vmem:[#allocation7 + $0x50] sm:$0xf]
        %v1557 = vld [vmem:[#allocation7 + $0x54] sm:$0xf]
        %v1558 = vld [vmem:[#allocation7 + $0x58] sm:$0xf]
        %v1559 = vld [vmem:[#allocation7 + $0x5c] sm:$0xf]
        %v1560 = vld [vmem:[#allocation7 + $0x60] sm:$0xf]
        %v1561 = vld [vmem:[#allocation7 + $0x64] sm:$0xf]
        %v1562 = vld [vmem:[#allocation7 + $0x68] sm:$0xf]
        %v1563 = vld [vmem:[#allocation7 + $0x6c] sm:$0xf]
        %v1564 = vld [vmem:[#allocation7 + $0x70] sm:$0xf]
        %v1565 = vld [vmem:[#allocation7 + $0x74] sm:$0xf]
        %v1566 = vld [vmem:[#allocation7 + $0x78] sm:$0xf]
        %v1567 = vld [vmem:[#allocation7 + $0x7c] sm:$0xf]
        %v1568 = vld [vmem:[%s4] sm:$0x1]
        %v1570 = vlaneseq
        %v1571 = vshrl.u32 %v1570, 7
        %v1572 = vsub.s32 0, %v1571
        %v1573 = vrot.slane %v1568, %v1572
        %v1607 = vunpack.c.l.b16 %v1536
        %v1608 = vunpack.c.l.b16 %v1537
        %v1609 = vunpack.c.l.b16 %v1538
        %v1610 = vunpack.c.l.b16 %v1539
        %v1611 = vunpack.c.l.b16 %v1540
        %v1612 = vunpack.c.l.b16 %v1541
        %v1613 = vunpack.c.l.b16 %v1542
        %v1614 = vunpack.c.l.b16 %v1543
        %v1615 = vunpack.c.l.b16 %v1544
        %v1616 = vunpack.c.l.b16 %v1545
        %v1617 = vunpack.c.l.b16 %v1546
        %v1618 = vunpack.c.l.b16 %v1547
        %v1619 = vunpack.c.l.b16 %v1548
        %v1620 = vunpack.c.l.b16 %v1549
        %v1621 = vunpack.c.l.b16 %v1550
        %v1622 = vunpack.c.l.b16 %v1551
        %v1623 = vunpack.c.l.b16 %v1552
        %v1624 = vunpack.c.l.b16 %v1553
        %v1625 = vunpack.c.l.b16 %v1554
        %v1626 = vunpack.c.l.b16 %v1555
        %v1627 = vunpack.c.l.b16 %v1556
        %v1628 = vunpack.c.l.b16 %v1557
        %v1629 = vunpack.c.l.b16 %v1558
        %v1630 = vunpack.c.l.b16 %v1559
        %v1631 = vunpack.c.l.b16 %v1560
        %v1632 = vunpack.c.l.b16 %v1561
        %v1633 = vunpack.c.l.b16 %v1562
        %v1634 = vunpack.c.l.b16 %v1563
        %v1635 = vunpack.c.l.b16 %v1564
        %v1636 = vunpack.c.l.b16 %v1565
        %v1637 = vunpack.c.l.b16 %v1566
        %v1638 = vunpack.c.l.b16 %v1567
        %v1639 = vpack.c.b16 %v1608, %v1607
        %v1640 = vpack.c.b16 %v1610, %v1609
        %v1641 = vpack.c.b16 %v1612, %v1611
        %v1642 = vpack.c.b16 %v1614, %v1613
        %v1643 = vpack.c.b16 %v1616, %v1615
        %v1644 = vpack.c.b16 %v1618, %v1617
        %v1645 = vpack.c.b16 %v1620, %v1619
        %v1646 = vpack.c.b16 %v1622, %v1621
        %v1647 = vpack.c.b16 %v1624, %v1623
        %v1648 = vpack.c.b16 %v1626, %v1625
        %v1649 = vpack.c.b16 %v1628, %v1627
        %v1650 = vpack.c.b16 %v1630, %v1629
        %v1651 = vpack.c.b16 %v1632, %v1631
        %v1652 = vpack.c.b16 %v1634, %v1633
        %v1653 = vpack.c.b16 %v1636, %v1635
        %v1654 = vpack.c.b16 %v1638, %v1637
        %1671 = vmatprep.subr.bf16.mxu0 0
        %1672 = vmatpush1.bf16.msra.mxu0 %v1639
        %1673 = vmatprep.subr.bf16.mxu0 0
        %1674 = vmatpush1.bf16.msra.mxu0 %v1640
        %1675 = vmatprep.subr.bf16.mxu0 0
        %1676 = vmatpush1.bf16.msra.mxu0 %v1641
        %1677 = vmatprep.subr.bf16.mxu0 0
        %1678 = vmatpush1.bf16.msra.mxu0 %v1642
        %1679 = vmatprep.subr.bf16.mxu0 0
        %1680 = vmatpush1.bf16.msra.mxu0 %v1643
        %1681 = vmatprep.subr.bf16.mxu0 0
        %1682 = vmatpush1.bf16.msra.mxu0 %v1644
        %1683 = vmatprep.subr.bf16.mxu0 0
        %1684 = vmatpush1.bf16.msra.mxu0 %v1645
        %1685 = vmatprep.subr.bf16.mxu0 0
        %1686 = vmatpush1.bf16.msra.mxu0 %v1646
        %1687 = vmatprep.subr.bf16.mxu0 0
        %1688 = vmatpush1.bf16.msra.mxu0 %v1647
        %1689 = vmatprep.subr.bf16.mxu0 0
        %1690 = vmatpush1.bf16.msra.mxu0 %v1648
        %1691 = vmatprep.subr.bf16.mxu0 0
        %1692 = vmatpush1.bf16.msra.mxu0 %v1649
        %1693 = vmatprep.subr.bf16.mxu0 0
        %1694 = vmatpush1.bf16.msra.mxu0 %v1650
        %1695 = vmatprep.subr.bf16.mxu0 0
        %1696 = vmatpush1.bf16.msra.mxu0 %v1651
        %1697 = vmatprep.subr.bf16.mxu0 0
        %1698 = vmatpush1.bf16.msra.mxu0 %v1652
        %1699 = vmatprep.subr.bf16.mxu0 0
        %1700 = vmatpush1.bf16.msra.mxu0 %v1653
        %1701 = vmatprep.subr.bf16.mxu0 0
        %1702 = vmatpush1.bf16.msra.mxu0 %v1654
        %1703 = vmatprep.mubr.bf16.mxu0 %v1473
        %1704 = vmatmul.mubr.bf16.gmra.mrb[0].mxu0 %v1472
        %v1705 = vpop.f32.mrb[0].mxu0
        %v1706 = vadd.f32 %v1573, %v1705
        %v1707 = vpop.f32.mrb[0].mxu0
        %v1708 = vpop.f32.mrb[0].mxu0
        %v1709 = vadd.f32 %v1573, %v1708
        %v1710 = vpop.f32.mrb[0].mxu0
        %1711 = vmatprep.mubr.bf16.mxu0 %v1475
        %1712 = vmatmul.mubr.bf16.gmra.mrb[0].mxu0 %v1474
        %v1713 = vpop.f32.mrb[0].mxu0
        %v1714 = vadd.f32 %v1573, %v1713
        %v1715 = vpop.f32.mrb[0].mxu0
        %v1716 = vpop.f32.mrb[0].mxu0
        %v1717 = vadd.f32 %v1573, %v1716
        %v1718 = vpop.f32.mrb[0].mxu0
        %1719 = vmatprep.mubr.bf16.mxu0 %v1477
        %1720 = vmatmul.mubr.bf16.gmra.mrb[0].mxu0 %v1476
        %v1721 = vpop.f32.mrb[0].mxu0
        %v1722 = vadd.f32 %v1573, %v1721
        %v1723 = vpop.f32.mrb[0].mxu0
        %v1724 = vpop.f32.mrb[0].mxu0
        %v1725 = vadd.f32 %v1573, %v1724
        %v1726 = vpop.f32.mrb[0].mxu0
        %1727 = vmatprep.mubr.bf16.mxu0 %v1479
        %1728 = vmatmul.mubr.bf16.gmra.mrb[0].mxu0 %v1478
        %v1729 = vpop.f32.mrb[0].mxu0
        %v1730 = vadd.f32 %v1573, %v1729
        %v1731 = vpop.f32.mrb[0].mxu0
        %v1732 = vpop.f32.mrb[0].mxu0
        %v1733 = vadd.f32 %v1573, %v1732
        %v1734 = vpop.f32.mrb[0].mxu0
        %1735 = vmatprep.mubr.bf16.mxu0 %v1481
        %1736 = vmatmul.mubr.bf16.gmra.mrb[0].mxu0 %v1480
        %v1737 = vpop.f32.mrb[0].mxu0
        %v1738 = vadd.f32 %v1573, %v1737
        %v1739 = vpop.f32.mrb[0].mxu0
        %v1740 = vpop.f32.mrb[0].mxu0
        %v1741 = vadd.f32 %v1573, %v1740
        %v1742 = vpop.f32.mrb[0].mxu0
        %1743 = vmatprep.mubr.bf16.mxu0 %v1483
        %1744 = vmatmul.mubr.bf16.gmra.mrb[0].mxu0 %v1482
        %v1745 = vpop.f32.mrb[0].mxu0
        %v1746 = vadd.f32 %v1573, %v1745
        %v1747 = vpop.f32.mrb[0].mxu0
        %v1748 = vpop.f32.mrb[0].mxu0
        %v1749 = vadd.f32 %v1573, %v1748
        %v1750 = vpop.f32.mrb[0].mxu0
        %1751 = vmatprep.mubr.bf16.mxu0 %v1485
        %1752 = vmatmul.mubr.bf16.gmra.mrb[0].mxu0 %v1484
        %v1753 = vpop.f32.mrb[0].mxu0
        %v1754 = vadd.f32 %v1573, %v1753
        %v1755 = vpop.f32.mrb[0].mxu0
        %v1756 = vpop.f32.mrb[0].mxu0
        %v1757 = vadd.f32 %v1573, %v1756
        %v1758 = vpop.f32.mrb[0].mxu0
        %1759 = vmatprep.mubr.bf16.mxu0 %v1487
        %1760 = vmatmul.mubr.bf16.gmra.mrb[0].mxu0 %v1486
        %v1761 = vpop.f32.mrb[0].mxu0
        %v1762 = vadd.f32 %v1573, %v1761
        %v1763 = vpop.f32.mrb[0].mxu0
        %v1764 = vpop.f32.mrb[0].mxu0
        %v1765 = vadd.f32 %v1573, %v1764
        %v1766 = vpop.f32.mrb[0].mxu0
        %1767 = vmatprep.mubr.bf16.mxu0 %v1489
        %1768 = vmatmul.mubr.bf16.gmra.mrb[0].mxu0 %v1488
        %v1769 = vpop.f32.mrb[0].mxu0
        %v1770 = vadd.f32 %v1573, %v1769
        %v1771 = vpop.f32.mrb[0].mxu0
        %v1772 = vpop.f32.mrb[0].mxu0
        %v1773 = vadd.f32 %v1573, %v1772
        %v1774 = vpop.f32.mrb[0].mxu0
        %1775 = vmatprep.mubr.bf16.mxu0 %v1491
        %1776 = vmatmul.mubr.bf16.gmra.mrb[0].mxu0 %v1490
        %v1777 = vpop.f32.mrb[0].mxu0
        %v1778 = vadd.f32 %v1573, %v1777
        %v1779 = vpop.f32.mrb[0].mxu0
        %v1780 = vpop.f32.mrb[0].mxu0
        %v1781 = vadd.f32 %v1573, %v1780
        %v1782 = vpop.f32.mrb[0].mxu0
        %1783 = vmatprep.mubr.bf16.mxu0 %v1493
        %1784 = vmatmul.mubr.bf16.gmra.mrb[0].mxu0 %v1492
        %v1785 = vpop.f32.mrb[0].mxu0
        %v1786 = vadd.f32 %v1573, %v1785
        %v1787 = vpop.f32.mrb[0].mxu0
        %v1788 = vpop.f32.mrb[0].mxu0
        %v1789 = vadd.f32 %v1573, %v1788
        %v1790 = vpop.f32.mrb[0].mxu0
        %1791 = vmatprep.mubr.bf16.mxu0 %v1495
        %1792 = vmatmul.mubr.bf16.gmra.mrb[0].mxu0 %v1494
        %v1793 = vpop.f32.mrb[0].mxu0
        %v1794 = vadd.f32 %v1573, %v1793
        %v1795 = vpop.f32.mrb[0].mxu0
        %v1796 = vpop.f32.mrb[0].mxu0
        %v1797 = vadd.f32 %v1573, %v1796
        %v1798 = vpop.f32.mrb[0].mxu0
        %1799 = vmatprep.mubr.bf16.mxu0 %v1497
        %1800 = vmatmul.mubr.bf16.gmra.mrb[0].mxu0 %v1496
        %v1801 = vpop.f32.mrb[0].mxu0
        %v1802 = vadd.f32 %v1573, %v1801
        %v1803 = vpop.f32.mrb[0].mxu0
        %v1804 = vpop.f32.mrb[0].mxu0
        %v1805 = vadd.f32 %v1573, %v1804
        %v1806 = vpop.f32.mrb[0].mxu0
        %1807 = vmatprep.mubr.bf16.mxu0 %v1499
        %1808 = vmatmul.mubr.bf16.gmra.mrb[0].mxu0 %v1498
        %v1809 = vpop.f32.mrb[0].mxu0
        %v1810 = vadd.f32 %v1573, %v1809
        %v1811 = vpop.f32.mrb[0].mxu0
        %v1812 = vpop.f32.mrb[0].mxu0
        %v1813 = vadd.f32 %v1573, %v1812
        %v1814 = vpop.f32.mrb[0].mxu0
        %1815 = vmatprep.mubr.bf16.mxu0 %v1501
        %1816 = vmatmul.mubr.bf16.gmra.mrb[0].mxu0 %v1500
        %v1817 = vpop.f32.mrb[0].mxu0
        %v1818 = vadd.f32 %v1573, %v1817
        %v1819 = vpop.f32.mrb[0].mxu0
        %v1820 = vpop.f32.mrb[0].mxu0
        %v1821 = vadd.f32 %v1573, %v1820
        %v1822 = vpop.f32.mrb[0].mxu0
        %1823 = vmatprep.mubr.bf16.mxu0 %v1503
        %1824 = vmatmul.mubr.bf16.gmra.mrb[0].mxu0 %v1502
        %v1825 = vpop.f32.mrb[0].mxu0
        %v1826 = vadd.f32 %v1573, %v1825
        %v1827 = vpop.f32.mrb[0].mxu0
        %v1828 = vpop.f32.mrb[0].mxu0
        %v1829 = vadd.f32 %v1573, %v1828
        %v1830 = vpop.f32.mrb[0].mxu0
        %1831 = vmatprep.mubr.bf16.mxu0 %v1505
        %1832 = vmatmul.mubr.bf16.gmra.mrb[0].mxu0 %v1504
        %v1833 = vpop.f32.mrb[0].mxu0
        %v1834 = vadd.f32 %v1573, %v1833
        %v1835 = vpop.f32.mrb[0].mxu0
        %v1836 = vpop.f32.mrb[0].mxu0
        %v1837 = vadd.f32 %v1573, %v1836
        %v1838 = vpop.f32.mrb[0].mxu0
        %1839 = vmatprep.mubr.bf16.mxu0 %v1507
        %1840 = vmatmul.mubr.bf16.gmra.mrb[0].mxu0 %v1506
        %v1841 = vpop.f32.mrb[0].mxu0
        %v1842 = vadd.f32 %v1573, %v1841
        %v1843 = vpop.f32.mrb[0].mxu0
        %v1844 = vpop.f32.mrb[0].mxu0
        %v1845 = vadd.f32 %v1573, %v1844
        %v1846 = vpop.f32.mrb[0].mxu0
        %1847 = vmatprep.mubr.bf16.mxu0 %v1509
        %1848 = vmatmul.mubr.bf16.gmra.mrb[0].mxu0 %v1508
        %v1849 = vpop.f32.mrb[0].mxu0
        %v1850 = vadd.f32 %v1573, %v1849
        %v1851 = vpop.f32.mrb[0].mxu0
        %v1852 = vpop.f32.mrb[0].mxu0
        %v1853 = vadd.f32 %v1573, %v1852
        %v1854 = vpop.f32.mrb[0].mxu0
        %1855 = vmatprep.mubr.bf16.mxu0 %v1511
        %1856 = vmatmul.mubr.bf16.gmra.mrb[0].mxu0 %v1510
        %v1857 = vpop.f32.mrb[0].mxu0
        %v1858 = vadd.f32 %v1573, %v1857
        %v1859 = vpop.f32.mrb[0].mxu0
        %v1860 = vpop.f32.mrb[0].mxu0
        %v1861 = vadd.f32 %v1573, %v1860
        %v1862 = vpop.f32.mrb[0].mxu0
        %1863 = vmatprep.mubr.bf16.mxu0 %v1513
        %1864 = vmatmul.mubr.bf16.gmra.mrb[0].mxu0 %v1512
        %v1865 = vpop.f32.mrb[0].mxu0
        %v1866 = vadd.f32 %v1573, %v1865
        %v1867 = vpop.f32.mrb[0].mxu0
        %v1868 = vpop.f32.mrb[0].mxu0
        %v1869 = vadd.f32 %v1573, %v1868
        %v1870 = vpop.f32.mrb[0].mxu0
        %1871 = vmatprep.mubr.bf16.mxu0 %v1515
        %1872 = vmatmul.mubr.bf16.gmra.mrb[0].mxu0 %v1514
        %v1873 = vpop.f32.mrb[0].mxu0
        %v1874 = vadd.f32 %v1573, %v1873
        %v1875 = vpop.f32.mrb[0].mxu0
        %v1876 = vpop.f32.mrb[0].mxu0
        %v1877 = vadd.f32 %v1573, %v1876
        %v1878 = vpop.f32.mrb[0].mxu0
        %1879 = vmatprep.mubr.bf16.mxu0 %v1517
        %1880 = vmatmul.mubr.bf16.gmra.mrb[0].mxu0 %v1516
        %v1881 = vpop.f32.mrb[0].mxu0
        %v1882 = vadd.f32 %v1573, %v1881
        %v1883 = vpop.f32.mrb[0].mxu0
        %v1884 = vpop.f32.mrb[0].mxu0
        %v1885 = vadd.f32 %v1573, %v1884
        %v1886 = vpop.f32.mrb[0].mxu0
        %1887 = vmatprep.mubr.bf16.mxu0 %v1519
        %1888 = vmatmul.mubr.bf16.gmra.mrb[0].mxu0 %v1518
        %v1889 = vpop.f32.mrb[0].mxu0
        %v1890 = vadd.f32 %v1573, %v1889
        %v1891 = vpop.f32.mrb[0].mxu0
        %v1892 = vpop.f32.mrb[0].mxu0
        %v1893 = vadd.f32 %v1573, %v1892
        %v1894 = vpop.f32.mrb[0].mxu0
        %1895 = vmatprep.mubr.bf16.mxu0 %v1521
        %1896 = vmatmul.mubr.bf16.gmra.mrb[0].mxu0 %v1520
        %v1897 = vpop.f32.mrb[0].mxu0
        %v1898 = vadd.f32 %v1573, %v1897
        %v1899 = vpop.f32.mrb[0].mxu0
        %v1900 = vpop.f32.mrb[0].mxu0
        %v1901 = vadd.f32 %v1573, %v1900
        %v1902 = vpop.f32.mrb[0].mxu0
        %1903 = vmatprep.mubr.bf16.mxu0 %v1523
        %1904 = vmatmul.mubr.bf16.gmra.mrb[0].mxu0 %v1522
        %v1905 = vpop.f32.mrb[0].mxu0
        %v1906 = vadd.f32 %v1573, %v1905
        %v1907 = vpop.f32.mrb[0].mxu0
        %v1908 = vpop.f32.mrb[0].mxu0
        %v1909 = vadd.f32 %v1573, %v1908
        %v1910 = vpop.f32.mrb[0].mxu0
        %1911 = vmatprep.mubr.bf16.mxu0 %v1525
        %1912 = vmatmul.mubr.bf16.gmra.mrb[0].mxu0 %v1524
        %v1913 = vpop.f32.mrb[0].mxu0
        %v1914 = vadd.f32 %v1573, %v1913
        %v1915 = vpop.f32.mrb[0].mxu0
        %v1916 = vpop.f32.mrb[0].mxu0
        %v1917 = vadd.f32 %v1573, %v1916
        %v1918 = vpop.f32.mrb[0].mxu0
        %1919 = vmatprep.mubr.bf16.mxu0 %v1527
        %1920 = vmatmul.mubr.bf16.gmra.mrb[0].mxu0 %v1526
        %v1921 = vpop.f32.mrb[0].mxu0
        %v1922 = vadd.f32 %v1573, %v1921
        %v1923 = vpop.f32.mrb[0].mxu0
        %v1924 = vpop.f32.mrb[0].mxu0
        %v1925 = vadd.f32 %v1573, %v1924
        %v1926 = vpop.f32.mrb[0].mxu0
        %1927 = vmatprep.mubr.bf16.mxu0 %v1529
        %1928 = vmatmul.mubr.bf16.gmra.mrb[0].mxu0 %v1528
        %v1929 = vpop.f32.mrb[0].mxu0
        %v1930 = vadd.f32 %v1573, %v1929
        %v1931 = vpop.f32.mrb[0].mxu0
        %v1932 = vpop.f32.mrb[0].mxu0
        %v1933 = vadd.f32 %v1573, %v1932
        %v1934 = vpop.f32.mrb[0].mxu0
        %1935 = vmatprep.mubr.bf16.mxu0 %v1531
        %1936 = vmatmul.mubr.bf16.gmra.mrb[0].mxu0 %v1530
        %v1937 = vpop.f32.mrb[0].mxu0
        %v1938 = vadd.f32 %v1573, %v1937
        %v1939 = vpop.f32.mrb[0].mxu0
        %v1940 = vpop.f32.mrb[0].mxu0
        %v1941 = vadd.f32 %v1573, %v1940
        %v1942 = vpop.f32.mrb[0].mxu0
        %1943 = vmatprep.mubr.bf16.mxu0 %v1533
        %1944 = vmatmul.mubr.bf16.gmra.mrb[0].mxu0 %v1532
        %v1945 = vpop.f32.mrb[0].mxu0
        %v1946 = vadd.f32 %v1573, %v1945
        %v1947 = vpop.f32.mrb[0].mxu0
        %v1948 = vpop.f32.mrb[0].mxu0
        %v1949 = vadd.f32 %v1573, %v1948
        %v1950 = vpop.f32.mrb[0].mxu0
        %1951 = vmatprep.mubr.bf16.mxu0 %v1535
        %1952 = vmatmul.mubr.bf16.gmra.mrb[0].mxu0 %v1534
        %v1953 = vpop.f32.mrb[0].mxu0
        %v1954 = vadd.f32 %v1573, %v1953
        %v1955 = vpop.f32.mrb[0].mxu0
        %v1956 = vpop.f32.mrb[0].mxu0
        %v1957 = vadd.f32 %v1573, %v1956
        %v1958 = vpop.f32.mrb[0].mxu0
        %1959 = vdwg.mxu0
        %1960 = vst [vmem:[%s271] sm:$0xff] %v1706
        %1961 = vst [vmem:[%s271 + $0x8] sm:$0xff] %v1709
        %1962 = vst [vmem:[%s271 + $0x10] sm:$0xff] %v1714
        %1963 = vst [vmem:[%s271 + $0x18] sm:$0xff] %v1717
        %1964 = vst [vmem:[%s271 + $0x20] sm:$0xff] %v1722
        %1965 = vst [vmem:[%s271 + $0x28] sm:$0xff] %v1725
        %1966 = vst [vmem:[%s271 + $0x30] sm:$0xff] %v1730
        %1967 = vst [vmem:[%s271 + $0x38] sm:$0xff] %v1733
        %1968 = vst [vmem:[%s271 + $0x40] sm:$0xff] %v1738
        %1969 = vst [vmem:[%s271 + $0x48] sm:$0xff] %v1741
        %1970 = vst [vmem:[%s271 + $0x50] sm:$0xff] %v1746
        %1971 = vst [vmem:[%s271 + $0x58] sm:$0xff] %v1749
        %1972 = vst [vmem:[%s271 + $0x60] sm:$0xff] %v1754
        %1973 = vst [vmem:[%s271 + $0x68] sm:$0xff] %v1757
        %1974 = vst [vmem:[%s271 + $0x70] sm:$0xff] %v1762
        %1975 = vst [vmem:[%s271 + $0x78] sm:$0xff] %v1765
        %1976 = vst [vmem:[%s271 + $0x80] sm:$0xff] %v1770
        %1977 = vst [vmem:[%s271 + $0x88] sm:$0xff] %v1773
        %1978 = vst [vmem:[%s271 + $0x90] sm:$0xff] %v1778
        %1979 = vst [vmem:[%s271 + $0x98] sm:$0xff] %v1781
        %1980 = vst [vmem:[%s271 + $0xa0] sm:$0xff] %v1786
        %1981 = vst [vmem:[%s271 + $0xa8] sm:$0xff] %v1789
        %1982 = vst [vmem:[%s271 + $0xb0] sm:$0xff] %v1794
        %1983 = vst [vmem:[%s271 + $0xb8] sm:$0xff] %v1797
        %1984 = vst [vmem:[%s271 + $0xc0] sm:$0xff] %v1802
        %1985 = vst [vmem:[%s271 + $0xc8] sm:$0xff] %v1805
        %1986 = vst [vmem:[%s271 + $0xd0] sm:$0xff] %v1810
        %1987 = vst [vmem:[%s271 + $0xd8] sm:$0xff] %v1813
        %1988 = vst [vmem:[%s271 + $0xe0] sm:$0xff] %v1818
        %1989 = vst [vmem:[%s271 + $0xe8] sm:$0xff] %v1821
        %1990 = vst [vmem:[%s271 + $0xf0] sm:$0xff] %v1826
        %1991 = vst [vmem:[%s271 + $0xf8] sm:$0xff] %v1829
        %1992 = vst [vmem:[%s271 + $0x100] sm:$0xff] %v1834
        %1993 = vst [vmem:[%s271 + $0x108] sm:$0xff] %v1837
        %1994 = vst [vmem:[%s271 + $0x110] sm:$0xff] %v1842
        %1995 = vst [vmem:[%s271 + $0x118] sm:$0xff] %v1845
        %1996 = vst [vmem:[%s271 + $0x120] sm:$0xff] %v1850
        %1997 = vst [vmem:[%s271 + $0x128] sm:$0xff] %v1853
        %1998 = vst [vmem:[%s271 + $0x130] sm:$0xff] %v1858
        %1999 = vst [vmem:[%s271 + $0x138] sm:$0xff] %v1861
        %2000 = vst [vmem:[%s271 + $0x140] sm:$0xff] %v1866
        %2001 = vst [vmem:[%s271 + $0x148] sm:$0xff] %v1869
        %2002 = vst [vmem:[%s271 + $0x150] sm:$0xff] %v1874
        %2003 = vst [vmem:[%s271 + $0x158] sm:$0xff] %v1877
        %2004 = vst [vmem:[%s271 + $0x160] sm:$0xff] %v1882
        %2005 = vst [vmem:[%s271 + $0x168] sm:$0xff] %v1885
        %2006 = vst [vmem:[%s271 + $0x170] sm:$0xff] %v1890
        %2007 = vst [vmem:[%s271 + $0x178] sm:$0xff] %v1893
        %2008 = vst [vmem:[%s271 + $0x180] sm:$0xff] %v1898
        %2009 = vst [vmem:[%s271 + $0x188] sm:$0xff] %v1901
        %2010 = vst [vmem:[%s271 + $0x190] sm:$0xff] %v1906
        %2011 = vst [vmem:[%s271 + $0x198] sm:$0xff] %v1909
        %2012 = vst [vmem:[%s271 + $0x1a0] sm:$0xff] %v1914
        %2013 = vst [vmem:[%s271 + $0x1a8] sm:$0xff] %v1917
        %2014 = vst [vmem:[%s271 + $0x1b0] sm:$0xff] %v1922
        %2015 = vst [vmem:[%s271 + $0x1b8] sm:$0xff] %v1925
        %2016 = vst [vmem:[%s271 + $0x1c0] sm:$0xff] %v1930
        %2017 = vst [vmem:[%s271 + $0x1c8] sm:$0xff] %v1933
        %2018 = vst [vmem:[%s271 + $0x1d0] sm:$0xff] %v1938
        %2019 = vst [vmem:[%s271 + $0x1d8] sm:$0xff] %v1941
        %2020 = vst [vmem:[%s271 + $0x1e0] sm:$0xff] %v1946
        %2021 = vst [vmem:[%s271 + $0x1e8] sm:$0xff] %v1949
        %2022 = vst [vmem:[%s271 + $0x1f0] sm:$0xff] %v1954
        %2023 = vst [vmem:[%s271 + $0x1f8] sm:$0xff] %v1957
        %s2024 = sand.u32 %s141, 1
        %s2025 = scalar_lea.sflag [#allocation4], %s2024
        %s2026 = sand.u32 %s141, 1
        %s2027 = smul.addr %s2026, 512
        %s2028 = scalar_lea.vmem [#allocation8], %s2027
        // Predicated region
        $region53: #{feed_forward_prepared.1} parent=39 // pred_check
          %p2029 = pneg %p151
        $region54: #{feed_forward_prepared.1} parent=39 // pred_check_branch
          %2031 = sbr.rel (%p2029) target = $region56
        $region55: #{feed_forward_prepared.1} parent=39 // pred_region
          %s2032 = smul.u32 64, %s23
          %s2034 = ssub.s32 8192, 8192
          %2035 = vsyncadd %s2025, %s2034
          %s2036 = smul.addr %s2032, 128
          %s2037 = scalar_lea.hbm %s5, %s2036
          %s2038 = sshll.u32 %s2028, 4
          %s2039 = int_to_ptr.vmem [resolvable:$true] %s2038
          %2044 = dma.vmem_to_hbm [thread:$0]  %s2039, 8192, %s2037, %s2025, 128, 128, 8
        $region56: #{feed_forward_prepared.1} parent=39 // pred_fallthru
          _
      $region40: #{feed_forward_prepared.1} parent=5 // pred_fallthru
        _
      %p2045 = scmp.le.s32.totalorder 2, %s18
      // Predicated region
      $region57: #{feed_forward_prepared.1} parent=5 // pred_check
        %p2046 = pneg %p2045
      $region58: #{feed_forward_prepared.1} parent=5 // pred_check_branch
        %2048 = sbr.rel (%p2046) target = $region60
      $region59: #{feed_forward_prepared.1} parent=5 // pred_region
        %s2049 = ssub.s32 %s18, 2
        // Predicated region
        $region61: #{feed_forward_prepared.1} parent=59 // pred_check
          %p2050 = pneg %p157
        $region62: #{feed_forward_prepared.1} parent=59 // pred_check_branch
          %2052 = sbr.rel (%p2050) target = $region64
        $region63: #{feed_forward_prepared.1} parent=59 // pred_region
          %s2053 = sand.u32 %s142, 1
          %s2054 = scalar_lea.sflag [#allocation4], %s2053
          %s2055 = sand.u32 %s142, 1
          %s2056 = smul.addr %s2055, 512
          %s2057 = scalar_lea.vmem [#allocation8], %s2056
          %2058 = dma.done %s2054, 8192
        $region64: #{feed_forward_prepared.1} parent=59 // pred_fallthru
          _
      $region60: #{feed_forward_prepared.1} parent=5 // pred_fallthru
        _
    $region6: #{feed_forward_prepared.1} parent=1 // loop_footer
      %s22 = sadd.s32 1, %s18
    $region7: #{feed_forward_prepared.1} parent=1 // loop_footer_branch
      %17 = sbr.rel target = $region3
    $region8: #{feed_forward_prepared.1} parent=1 // loop_exit
      _
    %2059 = vsyncpa [#allocation3], 1
    %s2060 = scalar_lea.sflag [#allocation3], 1
    %2061 = vsyncpa %s2060, 1
    %2062 = vsyncpa [#allocation6], 1
    %2063 = vsyncpa [#allocation4], 1
    %s2064 = scalar_lea.sflag [#allocation4], 1
    %2065 = vsyncpa %s2064, 1

</llo_original>
